<compile_context>
chip_gen: v5e
topology: v5e:2x2
jax: 0.10.0
libtpu: 0.0.40
codegen_flags: <defaults>
</compile_context>

<pallas_src>
import functools

import jax
import jax.numpy as jnp
from jax import lax
from jax.experimental import pallas as pl
from jax.experimental.pallas import tpu as pltpu


def _fp_kernel(pos_y_ref, pos_xt_ref, x_ref, w1_ref, b1_ref, w2_ref, b2_ref,
               out_ref, *, k):
    py = pos_y_ref[...].astype(jnp.float32)      # [TM, 3]  target positions (pos_skip tile)
    pxt = pos_xt_ref[...].astype(jnp.float32)    # [3, N]   source positions, coord-major
    x = x_ref[...].astype(jnp.float32)           # [N, C]   source features

    # Pairwise squared distances via three broadcasted coordinate differences (VPU only):
    #  - avoids the ||a||^2+||b||^2-2ab cancellation for nearby points,
    #  - the coord-major (3, N) source block is lane-dense (no 3 -> 128 lane padding),
    #  - nothing to recompute per step (no per-step ||px||^2 reduction needed at all).
    d = ((py[:, 0:1] - pxt[0:1, :]) ** 2
         + (py[:, 1:2] - pxt[1:2, :]) ** 2
         + (py[:, 2:3] - pxt[2:3, :]) ** 2)      # [TM, N], >= 0

    n_src = d.shape[1]
    col = lax.broadcasted_iota(jnp.int32, d.shape, 1)

    # Iterative exact k-NN selection.  The selected neighbor's squared distance IS rowmin,
    # so the inverse-distance weight is a [TM, 1] reciprocal (no full-tile [TM, N]
    # reciprocal) and the normalizer is accumulated on the fly (no final sum over W).
    # NOTE(perf): the reviewed packed-key argmin (distance bits | column in one int32) was
    # evaluated but intentionally NOT adopted: it truncates log2(N) mantissa bits from the
    # distance key and can flip neighbor selection for near-equidistant points, breaking
    # top_k-faithful semantics.  The tie-break keeps its own (cheap, int32) reduction.
    W = jnp.zeros_like(d)                         # sparse interpolation weights [TM, N]
    wsum = jnp.zeros((d.shape[0], 1), jnp.float32)
    for _ in range(k):                            # k is small & static -> unrolled
        rowmin = jnp.min(d, axis=1, keepdims=True)                    # [TM, 1]
        inv = 1.0 / jnp.maximum(rowmin, 1e-16)                        # [TM, 1]
        is_min = d == rowmin                                          # [TM, N]
        # tie-break: lowest column index among the minima (matches lax.top_k)
        min_col = jnp.min(jnp.where(is_min, col, n_src), axis=1, keepdims=True)
        sel = col == min_col                                          # [TM, N], one-hot
        W = jnp.where(sel, inv, W)
        wsum = wsum + inv
        d = jnp.where(sel, jnp.inf, d)

    # Gather-as-matmul on the MXU: weighted neighbor features, then normalize.
    y = jnp.dot(W, x, preferred_element_type=jnp.float32)             # [TM, C]
    y = y * (1.0 / wsum)

    # self.nn : Linear -> ReLU -> Linear (kept in f32; for large C the matmul operands can
    # be narrowed to bf16 with f32 accumulation on v6e/v7x).
    h = jnp.dot(y, w1_ref[...], preferred_element_type=jnp.float32) + b1_ref[...]
    h = jnp.maximum(h, 0.0)
    out = jnp.dot(h, w2_ref[...], preferred_element_type=jnp.float32) + b2_ref[...]
    out_ref[...] = out.astype(out_ref.dtype)


def _padded_bytes(shape, itemsize=4):
    """Bytes of a VMEM-resident f32 tile after (8, 128) padding of the last two dims."""
    shape = tuple(int(s) for s in shape)
    if len(shape) < 2:
        shape = (1,) * (2 - len(shape)) + shape
    lead = 1
    for s in shape[:-2]:
        lead *= s
    rows = -(-shape[-2] // 8) * 8
    cols = -(-shape[-1] // 128) * 128
    return lead * rows * cols * itemsize


def fp_module_forward(x, pos, x_skip, pos_skip, assign_index, params, *, k=3, tm=128):
    """Pallas FPModule forward. Returns (features_at_pos_skip, pos_skip).

    tm: target-point tile. 128 matches the v5e MXU row width; use 256 on v6e/v7x for large
    point clouds (keep it as large as VMEM allows).
    """
    del x_skip, assign_index  # TODO(synk): unused — see header comment.
    w1, b1, w2, b2 = params
    x = x.astype(jnp.float32)
    pos_t = pos.astype(jnp.float32).T            # (3, N): lane-dense source positions
    pos_skip = pos_skip.astype(jnp.float32)
    n_src, c_in = x.shape
    m_tgt = pos_skip.shape[0]
    hidden = w1.shape[1]
    c_out = w2.shape[1]

    # Pad the target dimension so every grid step gets a full tile; padded rows are
    # computed (harmlessly) and sliced away afterwards — no remainder constraint on m_tgt.
    m_pad = -(-m_tgt // tm) * tm
    if m_pad != m_tgt:
        pad = jnp.zeros((m_pad - m_tgt, pos_skip.shape[1]), pos_skip.dtype)
        pos_skip_p = jnp.concatenate([pos_skip, pad], axis=0)
    else:
        pos_skip_p = pos_skip

    grid = (m_pad // tm,)
    kernel = functools.partial(_fp_kernel, k=k)

    # Explicit VMEM budget: inputs/outputs (conservatively counted double-buffered) plus the
    # [tm, N] f32 temporaries (d, col, W, masks) live in the selection loop.  Scoped
    # defaults (16/32 MiB) are well below physical VMEM and would bind first as N grows.
    const_bytes = sum(_padded_bytes(a.shape) for a in (pos_t, x, w1, b1, w2, b2))
    io_bytes = _padded_bytes((tm, 3)) + _padded_bytes((tm, c_out))
    tmp_bytes = 6 * tm * (-(-n_src // 128) * 128) * 4
    vmem_limit = int(min(128 * 1024 * 1024,
                         max(32 * 1024 * 1024,
                             2 * (const_bytes + io_bytes) + tmp_bytes + (4 << 20))))

    # TODO(synk): for very large N (esp. v7x's 64 MiB VMEM), stream source points through a
    # second "arbitrary" grid axis with a running top-k scratch instead of keeping pos/x and
    # the [tm, N] temporaries fully resident; unnecessary at these shapes.
    out = pl.pallas_call(
        kernel,
        out_shape=jax.ShapeDtypeStruct((m_pad, c_out), jnp.float32),
        grid_spec=pltpu.PrefetchScalarGridSpec(
            num_scalar_prefetch=0,
            grid=grid,
            in_specs=[
                pl.BlockSpec((tm, 3), lambda i: (i, 0)),          # pos_skip tile (targets)
                # Constant-index inputs below: Pallas does not re-issue their DMA across
                # steps (block index never changes); pipeline_mode=pl.Buffered(1) would
                # additionally single-buffer them to halve their VMEM footprint.
                pl.BlockSpec((3, n_src), lambda i: (0, 0)),       # pos, coord-major
                pl.BlockSpec((n_src, c_in), lambda i: (0, 0)),    # x
                pl.BlockSpec((c_in, hidden), lambda i: (0, 0)),   # W1
                pl.BlockSpec((1, hidden), lambda i: (0, 0)),      # b1
                pl.BlockSpec((hidden, c_out), lambda i: (0, 0)),  # W2
                pl.BlockSpec((1, c_out), lambda i: (0, 0)),       # b2
            ],
            out_specs=pl.BlockSpec((tm, c_out), lambda i: (i, 0)),
        ),
        compiler_params=pltpu.CompilerParams(
            dimension_semantics=("parallel",),
            vmem_limit_bytes=vmem_limit),
    )(pos_skip_p, pos_t, x, w1, b1, w2, b2)
    if m_pad != m_tgt:
        out = out[:m_tgt]
    return out, pos_skip


def _reference(x, pos, pos_skip, params, k):
    """Pure-JAX reference of knn_interpolate + MLP."""
    w1, b1, w2, b2 = params
    d = jnp.sum((pos_skip[:, None, :] - pos[None, :, :]) ** 2, axis=-1)  # [M, N]
    neg_d, idx = jax.lax.top_k(-d, k)
    dist2 = -neg_d
    w = 1.0 / jnp.maximum(dist2, 1e-16)
    feats = x[idx]                                                       # [M, k, C]
    y = jnp.sum(feats * w[..., None], axis=1) / jnp.sum(w, axis=1, keepdims=True)
    h = jnp.maximum(y @ w1 + b1, 0.0)
    return h @ w2 + b2


if __name__ == "__main__":
    key = jax.random.PRNGKey(0)
    k_nn = 3
    n_src, m_tgt = 128, 128          # coarse points / fine (skip) points
    c_in, hidden, c_out = 32, 64, 32

    keys = jax.random.split(key, 8)
    x = jax.random.normal(keys[0], (n_src, c_in), jnp.float32)
    pos = jax.random.normal(keys[1], (n_src, 3), jnp.float32)
    x_skip = jax.random.normal(keys[2], (m_tgt, c_in), jnp.float32)       # unused (see TODO)
    pos_skip = jax.random.normal(keys[3], (m_tgt, 3), jnp.float32)
    assign_index = jnp.zeros((2, m_tgt * k_nn), jnp.int32)                # unused (see TODO)

    # Deterministic MLP parameters (self.nn = Lin(c_in, hidden) -> ReLU -> Lin(hidden, c_out))
    w1 = jax.random.normal(keys[4], (c_in, hidden), jnp.float32) * 0.1
    b1 = jax.random.normal(keys[5], (1, hidden), jnp.float32) * 0.1
    w2 = jax.random.normal(keys[6], (hidden, c_out), jnp.float32) * 0.1
    b2 = jax.random.normal(keys[7], (1, c_out), jnp.float32) * 0.1
    params = (w1, b1, w2, b2)

    out, pos_out = fp_module_forward(x, pos, x_skip, pos_skip, assign_index,
                                     params, k=k_nn, tm=128)
    out = jax.block_until_ready(out)

    ref = _reference(x, pos, pos_skip, params, k_nn)
    assert out.shape == (m_tgt, c_out)
    assert jnp.allclose(out, ref, atol=1e-3, rtol=1e-3), "mismatch vs reference"
    assert jnp.array_equal(pos_out, pos_skip.astype(jnp.float32))

    print("KERNEL_OK")
</pallas_src>

<mosaic_0001>
module attributes {stable_mosaic.version = 11 : i64} {
  func.func @_fp_kernel(%arg0: i32, %arg1: memref<128x3xf32, #tpu.memory_space<vmem>>, %arg2: memref<3x128xf32, #tpu.memory_space<vmem>>, %arg3: memref<128x32xf32, #tpu.memory_space<vmem>>, %arg4: memref<32x64xf32, #tpu.memory_space<vmem>>, %arg5: memref<1x64xf32, #tpu.memory_space<vmem>>, %arg6: memref<64x32xf32, #tpu.memory_space<vmem>>, %arg7: memref<1x32xf32, #tpu.memory_space<vmem>>, %arg8: memref<128x32xf32, #tpu.memory_space<vmem>>) attributes {dimension_semantics = [#tpu.dimension_semantics<parallel>], iteration_bounds = array<i64: 1>, scalar_prefetch = 0 : i64, scratch_operands = 0 : i64, tpu.core_type = #tpu.core_type<tc>, window_params = [{transform_indices = @transform_0, window_bounds = array<i64: 128, 3>}, {pipeline_mode = #tpu.pipeline_mode<synchronous>, transform_indices = @transform_1, window_bounds = array<i64: 3, 128>}, {pipeline_mode = #tpu.pipeline_mode<synchronous>, transform_indices = @transform_2, window_bounds = array<i64: 128, 32>}, {pipeline_mode = #tpu.pipeline_mode<synchronous>, transform_indices = @transform_3, window_bounds = array<i64: 32, 64>}, {pipeline_mode = #tpu.pipeline_mode<synchronous>, transform_indices = @transform_4, window_bounds = array<i64: 1, 64>}, {pipeline_mode = #tpu.pipeline_mode<synchronous>, transform_indices = @transform_5, window_bounds = array<i64: 64, 32>}, {pipeline_mode = #tpu.pipeline_mode<synchronous>, transform_indices = @transform_6, window_bounds = array<i64: 1, 32>}, {transform_indices = @transform_7, window_bounds = array<i64: 128, 32>}]} {
    %c0 = arith.constant 0 : index
    %c0_0 = arith.constant 0 : index
    %0 = vector.load %arg1[%c0, %c0_0] : memref<128x3xf32, #tpu.memory_space<vmem>>, vector<128x3xf32>
    %c0_1 = arith.constant 0 : index
    %c0_2 = arith.constant 0 : index
    %1 = vector.load %arg2[%c0_1, %c0_2] : memref<3x128xf32, #tpu.memory_space<vmem>>, vector<3x128xf32>
    %c0_3 = arith.constant 0 : index
    %c0_4 = arith.constant 0 : index
    %2 = vector.load %arg3[%c0_3, %c0_4] : memref<128x32xf32, #tpu.memory_space<vmem>>, vector<128x32xf32>
    %3 = vector.extract_strided_slice %0 {offsets = [0, 0], sizes = [128, 1], strides = [1, 1]} : vector<128x3xf32> to vector<128x1xf32>
    %4 = vector.extract_strided_slice %1 {offsets = [0, 0], sizes = [1, 128], strides = [1, 1]} : vector<3x128xf32> to vector<1x128xf32>
    %5 = vector.broadcast %3 : vector<128x1xf32> to vector<128x128xf32>
    %6 = vector.broadcast %4 : vector<1x128xf32> to vector<128x128xf32>
    %7 = arith.subf %5, %6 : vector<128x128xf32>
    %8 = arith.mulf %7, %7 : vector<128x128xf32>
    %9 = vector.extract_strided_slice %0 {offsets = [0, 1], sizes = [128, 1], strides = [1, 1]} : vector<128x3xf32> to vector<128x1xf32>
    %10 = vector.extract_strided_slice %1 {offsets = [1, 0], sizes = [1, 128], strides = [1, 1]} : vector<3x128xf32> to vector<1x128xf32>
    %11 = vector.broadcast %9 : vector<128x1xf32> to vector<128x128xf32>
    %12 = vector.broadcast %10 : vector<1x128xf32> to vector<128x128xf32>
    %13 = arith.subf %11, %12 : vector<128x128xf32>
    %14 = arith.mulf %13, %13 : vector<128x128xf32>
    %15 = arith.addf %8, %14 : vector<128x128xf32>
    %16 = vector.extract_strided_slice %0 {offsets = [0, 2], sizes = [128, 1], strides = [1, 1]} : vector<128x3xf32> to vector<128x1xf32>
    %17 = vector.extract_strided_slice %1 {offsets = [2, 0], sizes = [1, 128], strides = [1, 1]} : vector<3x128xf32> to vector<1x128xf32>
    %18 = vector.broadcast %16 : vector<128x1xf32> to vector<128x128xf32>
    %19 = vector.broadcast %17 : vector<1x128xf32> to vector<128x128xf32>
    %20 = arith.subf %18, %19 : vector<128x128xf32>
    %21 = arith.mulf %20, %20 : vector<128x128xf32>
    %22 = arith.addf %15, %21 : vector<128x128xf32>
    %23 = tpu.iota {dimensions = array<i32: 1>} : vector<128x128xi32>
    %cst = arith.constant 0.000000e+00 : f32
    %24 = vector.broadcast %cst : f32 to vector<128x128xf32>
    %cst_5 = arith.constant 0.000000e+00 : f32
    %25 = vector.broadcast %cst_5 : f32 to vector<128x1xf32>
    %cst_6 = arith.constant dense<0x7F800000> : vector<128xf32>
    %26 = vector.multi_reduction <minimumf>, %22, %cst_6 [1] : vector<128x128xf32> to vector<128xf32>
    %27 = vector.shape_cast %26 : vector<128xf32> to vector<128x1xf32>
    %cst_7 = arith.constant 1.000000e-16 : f32
    %28 = vector.broadcast %cst_7 : f32 to vector<128x1xf32>
    %29 = arith.maximumf %27, %28 : vector<128x1xf32>
    %cst_8 = arith.constant 1.000000e+00 : f32
    %30 = vector.broadcast %cst_8 : f32 to vector<128x1xf32>
    %31 = arith.divf %30, %29 : vector<128x1xf32>
    %32 = vector.broadcast %27 : vector<128x1xf32> to vector<128x128xf32>
    %33 = arith.cmpf oeq, %22, %32 : vector<128x128xf32>
    %c128_i32 = arith.constant 128 : i32
    %34 = vector.broadcast %c128_i32 : i32 to vector<128x128xi32>
    %35 = arith.select %33, %23, %34 : vector<128x128xi1>, vector<128x128xi32>
    %cst_9 = arith.constant dense<2147483647> : vector<128xi32>
    %36 = vector.multi_reduction <minsi>, %35, %cst_9 [1] : vector<128x128xi32> to vector<128xi32>
    %37 = vector.shape_cast %36 : vector<128xi32> to vector<128x1xi32>
    %38 = vector.broadcast %37 : vector<128x1xi32> to vector<128x128xi32>
    %39 = arith.cmpi eq, %23, %38 : vector<128x128xi32>
    %40 = vector.shape_cast %31 : vector<128x1xf32> to vector<128x1xf32>
    %41 = vector.broadcast %40 : vector<128x1xf32> to vector<128x128xf32>
    %42 = arith.select %39, %41, %24 : vector<128x128xi1>, vector<128x128xf32>
    %43 = arith.addf %25, %31 : vector<128x1xf32>
    %cst_10 = arith.constant 0x7F800000 : f32
    %44 = vector.broadcast %cst_10 : f32 to vector<128x128xf32>
    %45 = arith.select %39, %44, %22 : vector<128x128xi1>, vector<128x128xf32>
    %cst_11 = arith.constant dense<0x7F800000> : vector<128xf32>
    %46 = vector.multi_reduction <minimumf>, %45, %cst_11 [1] : vector<128x128xf32> to vector<128xf32>
    %47 = vector.shape_cast %46 : vector<128xf32> to vector<128x1xf32>
    %cst_12 = arith.constant 1.000000e-16 : f32
    %48 = vector.broadcast %cst_12 : f32 to vector<128x1xf32>
    %49 = arith.maximumf %47, %48 : vector<128x1xf32>
    %cst_13 = arith.constant 1.000000e+00 : f32
    %50 = vector.broadcast %cst_13 : f32 to vector<128x1xf32>
    %51 = arith.divf %50, %49 : vector<128x1xf32>
    %52 = vector.broadcast %47 : vector<128x1xf32> to vector<128x128xf32>
    %53 = arith.cmpf oeq, %45, %52 : vector<128x128xf32>
    %c128_i32_14 = arith.constant 128 : i32
    %54 = vector.broadcast %c128_i32_14 : i32 to vector<128x128xi32>
    %55 = arith.select %53, %23, %54 : vector<128x128xi1>, vector<128x128xi32>
    %cst_15 = arith.constant dense<2147483647> : vector<128xi32>
    %56 = vector.multi_reduction <minsi>, %55, %cst_15 [1] : vector<128x128xi32> to vector<128xi32>
    %57 = vector.shape_cast %56 : vector<128xi32> to vector<128x1xi32>
    %58 = vector.broadcast %57 : vector<128x1xi32> to vector<128x128xi32>
    %59 = arith.cmpi eq, %23, %58 : vector<128x128xi32>
    %60 = vector.shape_cast %51 : vector<128x1xf32> to vector<128x1xf32>
    %61 = vector.broadcast %60 : vector<128x1xf32> to vector<128x128xf32>
    %62 = arith.select %59, %61, %42 : vector<128x128xi1>, vector<128x128xf32>
    %63 = arith.addf %43, %51 : vector<128x1xf32>
    %cst_16 = arith.constant 0x7F800000 : f32
    %64 = vector.broadcast %cst_16 : f32 to vector<128x128xf32>
    %65 = arith.select %59, %64, %45 : vector<128x128xi1>, vector<128x128xf32>
    %cst_17 = arith.constant dense<0x7F800000> : vector<128xf32>
    %66 = vector.multi_reduction <minimumf>, %65, %cst_17 [1] : vector<128x128xf32> to vector<128xf32>
    %67 = vector.shape_cast %66 : vector<128xf32> to vector<128x1xf32>
    %cst_18 = arith.constant 1.000000e-16 : f32
    %68 = vector.broadcast %cst_18 : f32 to vector<128x1xf32>
    %69 = arith.maximumf %67, %68 : vector<128x1xf32>
    %cst_19 = arith.constant 1.000000e+00 : f32
    %70 = vector.broadcast %cst_19 : f32 to vector<128x1xf32>
    %71 = arith.divf %70, %69 : vector<128x1xf32>
    %72 = vector.broadcast %67 : vector<128x1xf32> to vector<128x128xf32>
    %73 = arith.cmpf oeq, %65, %72 : vector<128x128xf32>
    %c128_i32_20 = arith.constant 128 : i32
    %74 = vector.broadcast %c128_i32_20 : i32 to vector<128x128xi32>
    %75 = arith.select %73, %23, %74 : vector<128x128xi1>, vector<128x128xi32>
    %cst_21 = arith.constant dense<2147483647> : vector<128xi32>
    %76 = vector.multi_reduction <minsi>, %75, %cst_21 [1] : vector<128x128xi32> to vector<128xi32>
    %77 = vector.shape_cast %76 : vector<128xi32> to vector<128x1xi32>
    %78 = vector.broadcast %77 : vector<128x1xi32> to vector<128x128xi32>
    %79 = arith.cmpi eq, %23, %78 : vector<128x128xi32>
    %80 = vector.shape_cast %71 : vector<128x1xf32> to vector<128x1xf32>
    %81 = vector.broadcast %80 : vector<128x1xf32> to vector<128x128xf32>
    %82 = arith.select %79, %81, %62 : vector<128x128xi1>, vector<128x128xf32>
    %83 = arith.addf %63, %71 : vector<128x1xf32>
    %cst_22 = arith.constant dense<0.000000e+00> : vector<128x32xf32>
    %84 = tpu.matmul %82, %2, %cst_22 {dimension_numbers = #tpu.dot_dimension_numbers<[1], [0], [0], [1], [0, 0, 1, 1], [], []>} : vector<128x128xf32>, vector<128x32xf32>, vector<128x32xf32> -> vector<128x32xf32>
    %cst_23 = arith.constant 1.000000e+00 : f32
    %85 = vector.broadcast %cst_23 : f32 to vector<128x1xf32>
    %86 = arith.divf %85, %83 : vector<128x1xf32>
    %87 = vector.broadcast %86 : vector<128x1xf32> to vector<128x32xf32>
    %88 = arith.mulf %84, %87 : vector<128x32xf32>
    %c0_24 = arith.constant 0 : index
    %c0_25 = arith.constant 0 : index
    %89 = vector.load %arg4[%c0_24, %c0_25] : memref<32x64xf32, #tpu.memory_space<vmem>>, vector<32x64xf32>
    %cst_26 = arith.constant dense<0.000000e+00> : vector<128x64xf32>
    %90 = tpu.matmul %88, %89, %cst_26 {dimension_numbers = #tpu.dot_dimension_numbers<[1], [0], [0], [1], [0, 0, 1, 1], [], []>} : vector<128x32xf32>, vector<32x64xf32>, vector<128x64xf32> -> vector<128x64xf32>
    %c0_27 = arith.constant 0 : index
    %c0_28 = arith.constant 0 : index
    %91 = vector.load %arg5[%c0_27, %c0_28] : memref<1x64xf32, #tpu.memory_space<vmem>>, vector<1x64xf32>
    %92 = vector.broadcast %91 : vector<1x64xf32> to vector<128x64xf32>
    %93 = arith.addf %90, %92 : vector<128x64xf32>
    %cst_29 = arith.constant 0.000000e+00 : f32
    %94 = vector.broadcast %cst_29 : f32 to vector<128x64xf32>
    %95 = arith.maximumf %93, %94 : vector<128x64xf32>
    %c0_30 = arith.constant 0 : index
    %c0_31 = arith.constant 0 : index
    %96 = vector.load %arg6[%c0_30, %c0_31] : memref<64x32xf32, #tpu.memory_space<vmem>>, vector<64x32xf32>
    %cst_32 = arith.constant dense<0.000000e+00> : vector<128x32xf32>
    %97 = tpu.matmul %95, %96, %cst_32 {dimension_numbers = #tpu.dot_dimension_numbers<[1], [0], [0], [1], [0, 0, 1, 1], [], []>} : vector<128x64xf32>, vector<64x32xf32>, vector<128x32xf32> -> vector<128x32xf32>
    %c0_33 = arith.constant 0 : index
    %c0_34 = arith.constant 0 : index
    %98 = vector.load %arg7[%c0_33, %c0_34] : memref<1x32xf32, #tpu.memory_space<vmem>>, vector<1x32xf32>
    %99 = vector.broadcast %98 : vector<1x32xf32> to vector<128x32xf32>
    %100 = arith.addf %97, %99 : vector<128x32xf32>
    %c0_35 = arith.constant 0 : index
    %c0_36 = arith.constant 0 : index
    %101 = vector.load %arg8[%c0_35, %c0_36] : memref<128x32xf32, #tpu.memory_space<vmem>>, vector<128x32xf32>
    tpu.vector_store %arg8[%c0_35, %c0_36], %100 {strides = array<i32>} : memref<128x32xf32, #tpu.memory_space<vmem>>, vector<128x32xf32>,
    return
  }
  func.func @transform_0(%arg0: i32) -> (i32, i32) {
    %c0_i32 = arith.constant 0 : i32
    %c0_i32_0 = arith.constant 0 : i32
    return %arg0, %c0_i32 : i32, i32
  }
  func.func @transform_1(%arg0: i32) -> (i32, i32) {
    %c0_i32 = arith.constant 0 : i32
    %c0_i32_0 = arith.constant 0 : i32
    %c0_i32_1 = arith.constant 0 : i32
    return %c0_i32, %c0_i32_0 : i32, i32
  }
  func.func @transform_2(%arg0: i32) -> (i32, i32) {
    %c0_i32 = arith.constant 0 : i32
    %c0_i32_0 = arith.constant 0 : i32
    %c0_i32_1 = arith.constant 0 : i32
    return %c0_i32, %c0_i32_0 : i32, i32
  }
  func.func @transform_3(%arg0: i32) -> (i32, i32) {
    %c0_i32 = arith.constant 0 : i32
    %c0_i32_0 = arith.constant 0 : i32
    %c0_i32_1 = arith.constant 0 : i32
    return %c0_i32, %c0_i32_0 : i32, i32
  }
  func.func @transform_4(%arg0: i32) -> (i32, i32) {
    %c0_i32 = arith.constant 0 : i32
    %c0_i32_0 = arith.constant 0 : i32
    %c0_i32_1 = arith.constant 0 : i32
    return %c0_i32, %c0_i32_0 : i32, i32
  }
  func.func @transform_5(%arg0: i32) -> (i32, i32) {
    %c0_i32 = arith.constant 0 : i32
    %c0_i32_0 = arith.constant 0 : i32
    %c0_i32_1 = arith.constant 0 : i32
    return %c0_i32, %c0_i32_0 : i32, i32
  }
  func.func @transform_6(%arg0: i32) -> (i32, i32) {
    %c0_i32 = arith.constant 0 : i32
    %c0_i32_0 = arith.constant 0 : i32
    %c0_i32_1 = arith.constant 0 : i32
    return %c0_i32, %c0_i32_0 : i32, i32
  }
  func.func @transform_7(%arg0: i32) -> (i32, i32) {
    %c0_i32 = arith.constant 0 : i32
    %c0_i32_0 = arith.constant 0 : i32
    return %arg0, %c0_i32 : i32, i32
  }
}

</mosaic_0001>

<llo_original>
// kernel: tpu_custom_call.1
$region0: #{tpu_custom_call.1}
  #allocation0 [shape = 'u32[]', space=smem, size = 0x4, offset = 0x4, fixed_abs, tag = 'smem constant byte address 0x4 - core index']
  #allocation1 [shape = 'u32[72,128]{1,0:T(1,128)}', space=vmem, size = 0x9000, scoped, tag = 'internal scratch']
  %s0 = inlined_call_operand.vmem [shape: f32[128,3], index: 0, kind: input, shape index: {}]
  %s1 = inlined_call_operand.vmem [shape: f32[3,128], index: 1, kind: input, shape index: {}]
  %s2 = inlined_call_operand.vmem [shape: f32[128,32], index: 2, kind: input, shape index: {}]
  %s3 = inlined_call_operand.vmem [shape: f32[32,64], index: 3, kind: input, shape index: {}]
  %s4 = inlined_call_operand.vmem [shape: f32[1,64], index: 4, kind: input, shape index: {}]
  %s5 = inlined_call_operand.vmem [shape: f32[64,32], index: 5, kind: input, shape index: {}]
  %s6 = inlined_call_operand.vmem [shape: f32[1,32], index: 6, kind: input, shape index: {}]
  %s7 = inlined_call_operand.vmem [shape: f32[128,32], index: 7, kind: output, shape index: {}]
  %s8 = sld [smem:[#allocation0]]
  $region38: #{tpu_custom_call.1} parent=0
    _
  %s10 = ssub.s32 1, %s8
  %s11 = scalar_select 0, %s10, %s8
  // Predicated region
  $region2: #{tpu_custom_call.1} parent=0 // pred_check
    _
  $region3: #{tpu_custom_call.1} parent=0 // pred_check_branch
    %13 = sbr.rel (0) target = $region5
  $region4: #{tpu_custom_call.1} parent=0 // pred_region
    _
  $region5: #{tpu_custom_call.1} parent=0 // pred_fallthru
    _
  // Predicated region
  $region6: #{tpu_custom_call.1} parent=0 // pred_check
    _
  $region7: #{tpu_custom_call.1} parent=0 // pred_check_branch
    %15 = sbr.rel (0) target = $region9
  $region8: #{tpu_custom_call.1} parent=0 // pred_region
    _
  $region9: #{tpu_custom_call.1} parent=0 // pred_fallthru
    _
  // Predicated region
  $region10: #{tpu_custom_call.1} parent=0 // pred_check
    _
  $region11: #{tpu_custom_call.1} parent=0 // pred_check_branch
    %17 = sbr.rel (0) target = $region13
  $region12: #{tpu_custom_call.1} parent=0 // pred_region
    _
  $region13: #{tpu_custom_call.1} parent=0 // pred_fallthru
    _
  // Predicated region
  $region14: #{tpu_custom_call.1} parent=0 // pred_check
    _
  $region15: #{tpu_custom_call.1} parent=0 // pred_check_branch
    %19 = sbr.rel (0) target = $region17
  $region16: #{tpu_custom_call.1} parent=0 // pred_region
    _
  $region17: #{tpu_custom_call.1} parent=0 // pred_fallthru
    _
  // Predicated region
  $region18: #{tpu_custom_call.1} parent=0 // pred_check
    _
  $region19: #{tpu_custom_call.1} parent=0 // pred_check_branch
    %21 = sbr.rel (0) target = $region21
  $region20: #{tpu_custom_call.1} parent=0 // pred_region
    _
  $region21: #{tpu_custom_call.1} parent=0 // pred_fallthru
    _
  // Predicated region
  $region22: #{tpu_custom_call.1} parent=0 // pred_check
    _
  $region23: #{tpu_custom_call.1} parent=0 // pred_check_branch
    %23 = sbr.rel (0) target = $region25
  $region24: #{tpu_custom_call.1} parent=0 // pred_region
    _
  $region25: #{tpu_custom_call.1} parent=0 // pred_fallthru
    _
  // Predicated region
  $region26: #{tpu_custom_call.1} parent=0 // pred_check
    _
  $region27: #{tpu_custom_call.1} parent=0 // pred_check_branch
    %25 = sbr.rel (0) target = $region29
  $region28: #{tpu_custom_call.1} parent=0 // pred_region
    _
  $region29: #{tpu_custom_call.1} parent=0 // pred_fallthru
    _
  %v26 = vld [vmem:[%s0] sm:$0xff]
  %v27 = vld [vmem:[%s0 + $0x8] sm:$0xff]
  %v28 = vld [vmem:[%s0 + $0x10] sm:$0xff]
  %v29 = vld [vmem:[%s0 + $0x18] sm:$0xff]
  %v30 = vld [vmem:[%s0 + $0x20] sm:$0xff]
  %v31 = vld [vmem:[%s0 + $0x28] sm:$0xff]
  %v32 = vld [vmem:[%s0 + $0x30] sm:$0xff]
  %v33 = vld [vmem:[%s0 + $0x38] sm:$0xff]
  %v34 = vld [vmem:[%s0 + $0x40] sm:$0xff]
  %v35 = vld [vmem:[%s0 + $0x48] sm:$0xff]
  %v36 = vld [vmem:[%s0 + $0x50] sm:$0xff]
  %v37 = vld [vmem:[%s0 + $0x58] sm:$0xff]
  %v38 = vld [vmem:[%s0 + $0x60] sm:$0xff]
  %v39 = vld [vmem:[%s0 + $0x68] sm:$0xff]
  %v40 = vld [vmem:[%s0 + $0x70] sm:$0xff]
  %v41 = vld [vmem:[%s0 + $0x78] sm:$0xff]
  %v42 = vld [vmem:[%s1] sm:$0x7]
  %v43 = vld [vmem:[%s2] sm:$0xff]
  %v44 = vld [vmem:[%s2 + $0x8] sm:$0xff]
  %v45 = vld [vmem:[%s2 + $0x10] sm:$0xff]
  %v46 = vld [vmem:[%s2 + $0x18] sm:$0xff]
  %v47 = vld [vmem:[%s2 + $0x20] sm:$0xff]
  %v48 = vld [vmem:[%s2 + $0x28] sm:$0xff]
  %v49 = vld [vmem:[%s2 + $0x30] sm:$0xff]
  %v50 = vld [vmem:[%s2 + $0x38] sm:$0xff]
  %v51 = vld [vmem:[%s2 + $0x40] sm:$0xff]
  %v52 = vld [vmem:[%s2 + $0x48] sm:$0xff]
  %v53 = vld [vmem:[%s2 + $0x50] sm:$0xff]
  %v54 = vld [vmem:[%s2 + $0x58] sm:$0xff]
  %v55 = vld [vmem:[%s2 + $0x60] sm:$0xff]
  %v56 = vld [vmem:[%s2 + $0x68] sm:$0xff]
  %v57 = vld [vmem:[%s2 + $0x70] sm:$0xff]
  %v58 = vld [vmem:[%s2 + $0x78] sm:$0xff]
  %60 = vset.pattern.permute.xlu0 0
  %61 = vperm.xlu0 %60, %v26
  %v62 = vpop.permute.xlu0 %61
  %65 = vset.pattern.permute.xlu0 0
  %66 = vperm.xlu0 %65, %v27
  %v67 = vpop.permute.xlu0 %66
  %70 = vset.pattern.permute.xlu0 0
  %71 = vperm.xlu0 %70, %v28
  %v72 = vpop.permute.xlu0 %71
  %75 = vset.pattern.permute.xlu0 0
  %76 = vperm.xlu0 %75, %v29
  %v77 = vpop.permute.xlu0 %76
  %80 = vset.pattern.permute.xlu0 0
  %81 = vperm.xlu0 %80, %v30
  %v82 = vpop.permute.xlu0 %81
  %85 = vset.pattern.permute.xlu0 0
  %86 = vperm.xlu0 %85, %v31
  %v87 = vpop.permute.xlu0 %86
  %90 = vset.pattern.permute.xlu0 0
  %91 = vperm.xlu0 %90, %v32
  %v92 = vpop.permute.xlu0 %91
  %95 = vset.pattern.permute.xlu0 0
  %96 = vperm.xlu0 %95, %v33
  %v97 = vpop.permute.xlu0 %96
  %100 = vset.pattern.permute.xlu0 0
  %101 = vperm.xlu0 %100, %v34
  %v102 = vpop.permute.xlu0 %101
  %105 = vset.pattern.permute.xlu0 0
  %106 = vperm.xlu0 %105, %v35
  %v107 = vpop.permute.xlu0 %106
  %110 = vset.pattern.permute.xlu0 0
  %111 = vperm.xlu0 %110, %v36
  %v112 = vpop.permute.xlu0 %111
  %115 = vset.pattern.permute.xlu0 0
  %116 = vperm.xlu0 %115, %v37
  %v117 = vpop.permute.xlu0 %116
  %120 = vset.pattern.permute.xlu0 0
  %121 = vperm.xlu0 %120, %v38
  %v122 = vpop.permute.xlu0 %121
  %125 = vset.pattern.permute.xlu0 0
  %126 = vperm.xlu0 %125, %v39
  %v127 = vpop.permute.xlu0 %126
  %130 = vset.pattern.permute.xlu0 0
  %131 = vperm.xlu0 %130, %v40
  %v132 = vpop.permute.xlu0 %131
  %135 = vset.pattern.permute.xlu0 0
  %136 = vperm.xlu0 %135, %v41
  %v137 = vpop.permute.xlu0 %136
  %v139 = vperm.slane %v42, 0
  %v140 = vsub.f32 %v62, %v139
  %v141 = vsub.f32 %v67, %v139
  %v142 = vsub.f32 %v72, %v139
  %v143 = vsub.f32 %v77, %v139
  %v144 = vsub.f32 %v82, %v139
  %v145 = vsub.f32 %v87, %v139
  %v146 = vsub.f32 %v92, %v139
  %v147 = vsub.f32 %v97, %v139
  %v148 = vsub.f32 %v102, %v139
  %v149 = vsub.f32 %v107, %v139
  %v150 = vsub.f32 %v112, %v139
  %v151 = vsub.f32 %v117, %v139
  %v152 = vsub.f32 %v122, %v139
  %v153 = vsub.f32 %v127, %v139
  %v154 = vsub.f32 %v132, %v139
  %v155 = vsub.f32 %v137, %v139
  %v156 = vmul.f32 %v140, %v140
  %v157 = vmul.f32 %v141, %v141
  %v158 = vmul.f32 %v142, %v142
  %v159 = vmul.f32 %v143, %v143
  %v160 = vmul.f32 %v144, %v144
  %v161 = vmul.f32 %v145, %v145
  %v162 = vmul.f32 %v146, %v146
  %v163 = vmul.f32 %v147, %v147
  %v164 = vmul.f32 %v148, %v148
  %v165 = vmul.f32 %v149, %v149
  %v166 = vmul.f32 %v150, %v150
  %v167 = vmul.f32 %v151, %v151
  %v168 = vmul.f32 %v152, %v152
  %v169 = vmul.f32 %v153, %v153
  %v170 = vmul.f32 %v154, %v154
  %v171 = vmul.f32 %v155, %v155
  %172 = vset.pattern.permute.xlu0 1
  %173 = vperm.xlu0 %172, %v26
  %v174 = vpop.permute.xlu0 %173
  %176 = vset.pattern.permute.xlu0 1
  %177 = vperm.xlu0 %176, %v27
  %v178 = vpop.permute.xlu0 %177
  %180 = vset.pattern.permute.xlu0 1
  %181 = vperm.xlu0 %180, %v28
  %v182 = vpop.permute.xlu0 %181
  %184 = vset.pattern.permute.xlu0 1
  %185 = vperm.xlu0 %184, %v29
  %v186 = vpop.permute.xlu0 %185
  %188 = vset.pattern.permute.xlu0 1
  %189 = vperm.xlu0 %188, %v30
  %v190 = vpop.permute.xlu0 %189
  %192 = vset.pattern.permute.xlu0 1
  %193 = vperm.xlu0 %192, %v31
  %v194 = vpop.permute.xlu0 %193
  %196 = vset.pattern.permute.xlu0 1
  %197 = vperm.xlu0 %196, %v32
  %v198 = vpop.permute.xlu0 %197
  %200 = vset.pattern.permute.xlu0 1
  %201 = vperm.xlu0 %200, %v33
  %v202 = vpop.permute.xlu0 %201
  %204 = vset.pattern.permute.xlu0 1
  %205 = vperm.xlu0 %204, %v34
  %v206 = vpop.permute.xlu0 %205
  %208 = vset.pattern.permute.xlu0 1
  %209 = vperm.xlu0 %208, %v35
  %v210 = vpop.permute.xlu0 %209
  %212 = vset.pattern.permute.xlu0 1
  %213 = vperm.xlu0 %212, %v36
  %v214 = vpop.permute.xlu0 %213
  %216 = vset.pattern.permute.xlu0 1
  %217 = vperm.xlu0 %216, %v37
  %v218 = vpop.permute.xlu0 %217
  %220 = vset.pattern.permute.xlu0 1
  %221 = vperm.xlu0 %220, %v38
  %v222 = vpop.permute.xlu0 %221
  %224 = vset.pattern.permute.xlu0 1
  %225 = vperm.xlu0 %224, %v39
  %v226 = vpop.permute.xlu0 %225
  %228 = vset.pattern.permute.xlu0 1
  %229 = vperm.xlu0 %228, %v40
  %v230 = vpop.permute.xlu0 %229
  %232 = vset.pattern.permute.xlu0 1
  %233 = vperm.xlu0 %232, %v41
  %v234 = vpop.permute.xlu0 %233
  %v236 = vperm.slane %v42, 1
  %v237 = vsub.f32 %v174, %v236
  %v238 = vsub.f32 %v178, %v236
  %v239 = vsub.f32 %v182, %v236
  %v240 = vsub.f32 %v186, %v236
  %v241 = vsub.f32 %v190, %v236
  %v242 = vsub.f32 %v194, %v236
  %v243 = vsub.f32 %v198, %v236
  %v244 = vsub.f32 %v202, %v236
  %v245 = vsub.f32 %v206, %v236
  %v246 = vsub.f32 %v210, %v236
  %v247 = vsub.f32 %v214, %v236
  %v248 = vsub.f32 %v218, %v236
  %v249 = vsub.f32 %v222, %v236
  %v250 = vsub.f32 %v226, %v236
  %v251 = vsub.f32 %v230, %v236
  %v252 = vsub.f32 %v234, %v236
  %v253 = vmul.f32 %v237, %v237
  %v254 = vmul.f32 %v238, %v238
  %v255 = vmul.f32 %v239, %v239
  %v256 = vmul.f32 %v240, %v240
  %v257 = vmul.f32 %v241, %v241
  %v258 = vmul.f32 %v242, %v242
  %v259 = vmul.f32 %v243, %v243
  %v260 = vmul.f32 %v244, %v244
  %v261 = vmul.f32 %v245, %v245
  %v262 = vmul.f32 %v246, %v246
  %v263 = vmul.f32 %v247, %v247
  %v264 = vmul.f32 %v248, %v248
  %v265 = vmul.f32 %v249, %v249
  %v266 = vmul.f32 %v250, %v250
  %v267 = vmul.f32 %v251, %v251
  %v268 = vmul.f32 %v252, %v252
  %v269 = vadd.f32 %v156, %v253
  %v270 = vadd.f32 %v157, %v254
  %v271 = vadd.f32 %v158, %v255
  %v272 = vadd.f32 %v159, %v256
  %v273 = vadd.f32 %v160, %v257
  %v274 = vadd.f32 %v161, %v258
  %v275 = vadd.f32 %v162, %v259
  %v276 = vadd.f32 %v163, %v260
  %v277 = vadd.f32 %v164, %v261
  %v278 = vadd.f32 %v165, %v262
  %v279 = vadd.f32 %v166, %v263
  %v280 = vadd.f32 %v167, %v264
  %v281 = vadd.f32 %v168, %v265
  %v282 = vadd.f32 %v169, %v266
  %v283 = vadd.f32 %v170, %v267
  %v284 = vadd.f32 %v171, %v268
  %285 = vset.pattern.permute.xlu0 2
  %286 = vperm.xlu0 %285, %v26
  %v287 = vpop.permute.xlu0 %286
  %289 = vset.pattern.permute.xlu0 2
  %290 = vperm.xlu0 %289, %v27
  %v291 = vpop.permute.xlu0 %290
  %293 = vset.pattern.permute.xlu0 2
  %294 = vperm.xlu0 %293, %v28
  %v295 = vpop.permute.xlu0 %294
  %297 = vset.pattern.permute.xlu0 2
  %298 = vperm.xlu0 %297, %v29
  %v299 = vpop.permute.xlu0 %298
  %301 = vset.pattern.permute.xlu0 2
  %302 = vperm.xlu0 %301, %v30
  %v303 = vpop.permute.xlu0 %302
  %305 = vset.pattern.permute.xlu0 2
  %306 = vperm.xlu0 %305, %v31
  %v307 = vpop.permute.xlu0 %306
  %309 = vset.pattern.permute.xlu0 2
  %310 = vperm.xlu0 %309, %v32
  %v311 = vpop.permute.xlu0 %310
  %313 = vset.pattern.permute.xlu0 2
  %314 = vperm.xlu0 %313, %v33
  %v315 = vpop.permute.xlu0 %314
  %317 = vset.pattern.permute.xlu0 2
  %318 = vperm.xlu0 %317, %v34
  %v319 = vpop.permute.xlu0 %318
  %321 = vset.pattern.permute.xlu0 2
  %322 = vperm.xlu0 %321, %v35
  %v323 = vpop.permute.xlu0 %322
  %325 = vset.pattern.permute.xlu0 2
  %326 = vperm.xlu0 %325, %v36
  %v327 = vpop.permute.xlu0 %326
  %329 = vset.pattern.permute.xlu0 2
  %330 = vperm.xlu0 %329, %v37
  %v331 = vpop.permute.xlu0 %330
  %333 = vset.pattern.permute.xlu0 2
  %334 = vperm.xlu0 %333, %v38
  %v335 = vpop.permute.xlu0 %334
  %337 = vset.pattern.permute.xlu0 2
  %338 = vperm.xlu0 %337, %v39
  %v339 = vpop.permute.xlu0 %338
  %341 = vset.pattern.permute.xlu0 2
  %342 = vperm.xlu0 %341, %v40
  %v343 = vpop.permute.xlu0 %342
  %345 = vset.pattern.permute.xlu0 2
  %346 = vperm.xlu0 %345, %v41
  %v347 = vpop.permute.xlu0 %346
  %v349 = vperm.slane %v42, 2
  %v350 = vsub.f32 %v287, %v349
  %v351 = vsub.f32 %v291, %v349
  %v352 = vsub.f32 %v295, %v349
  %v353 = vsub.f32 %v299, %v349
  %v354 = vsub.f32 %v303, %v349
  %v355 = vsub.f32 %v307, %v349
  %v356 = vsub.f32 %v311, %v349
  %v357 = vsub.f32 %v315, %v349
  %v358 = vsub.f32 %v319, %v349
  %v359 = vsub.f32 %v323, %v349
  %v360 = vsub.f32 %v327, %v349
  %v361 = vsub.f32 %v331, %v349
  %v362 = vsub.f32 %v335, %v349
  %v363 = vsub.f32 %v339, %v349
  %v364 = vsub.f32 %v343, %v349
  %v365 = vsub.f32 %v347, %v349
  %v366 = vmul.f32 %v350, %v350
  %v367 = vmul.f32 %v351, %v351
  %v368 = vmul.f32 %v352, %v352
  %v369 = vmul.f32 %v353, %v353
  %v370 = vmul.f32 %v354, %v354
  %v371 = vmul.f32 %v355, %v355
  %v372 = vmul.f32 %v356, %v356
  %v373 = vmul.f32 %v357, %v357
  %v374 = vmul.f32 %v358, %v358
  %v375 = vmul.f32 %v359, %v359
  %v376 = vmul.f32 %v360, %v360
  %v377 = vmul.f32 %v361, %v361
  %v378 = vmul.f32 %v362, %v362
  %v379 = vmul.f32 %v363, %v363
  %v380 = vmul.f32 %v364, %v364
  %v381 = vmul.f32 %v365, %v365
  %v382 = vadd.f32 %v269, %v366
  %v383 = vadd.f32 %v270, %v367
  %v384 = vadd.f32 %v271, %v368
  %v385 = vadd.f32 %v272, %v369
  %v386 = vadd.f32 %v273, %v370
  %v387 = vadd.f32 %v274, %v371
  %v388 = vadd.f32 %v275, %v372
  %v389 = vadd.f32 %v276, %v373
  %v390 = vadd.f32 %v277, %v374
  %v391 = vadd.f32 %v278, %v375
  %v392 = vadd.f32 %v279, %v376
  %v393 = vadd.f32 %v280, %v377
  %v394 = vadd.f32 %v281, %v378
  %v395 = vadd.f32 %v282, %v379
  %v396 = vadd.f32 %v283, %v380
  %v397 = vadd.f32 %v284, %v381
  %v398 = vlaneseq
  %v399 = vand.u32 %v398, 127
  %400 = vmin.xlane.f32.xlu0 %v382
  %v401 = vpop.xlane.xlu0 %400
  %402 = vmin.xlane.f32.xlu0 %v383
  %v403 = vpop.xlane.xlu0 %402
  %404 = vmin.xlane.f32.xlu0 %v384
  %v405 = vpop.xlane.xlu0 %404
  %406 = vmin.xlane.f32.xlu0 %v385
  %v407 = vpop.xlane.xlu0 %406
  %408 = vmin.xlane.f32.xlu0 %v386
  %v409 = vpop.xlane.xlu0 %408
  %410 = vmin.xlane.f32.xlu0 %v387
  %v411 = vpop.xlane.xlu0 %410
  %412 = vmin.xlane.f32.xlu0 %v388
  %v413 = vpop.xlane.xlu0 %412
  %414 = vmin.xlane.f32.xlu0 %v389
  %v415 = vpop.xlane.xlu0 %414
  %416 = vmin.xlane.f32.xlu0 %v390
  %v417 = vpop.xlane.xlu0 %416
  %418 = vmin.xlane.f32.xlu0 %v391
  %v419 = vpop.xlane.xlu0 %418
  %420 = vmin.xlane.f32.xlu0 %v392
  %v421 = vpop.xlane.xlu0 %420
  %422 = vmin.xlane.f32.xlu0 %v393
  %v423 = vpop.xlane.xlu0 %422
  %424 = vmin.xlane.f32.xlu0 %v394
  %v425 = vpop.xlane.xlu0 %424
  %426 = vmin.xlane.f32.xlu0 %v395
  %v427 = vpop.xlane.xlu0 %426
  %428 = vmin.xlane.f32.xlu0 %v396
  %v429 = vpop.xlane.xlu0 %428
  %430 = vmin.xlane.f32.xlu0 %v397
  %v431 = vpop.xlane.xlu0 %430
  %v432 = vmax.f32 %v401, 1e-16
  %v433 = vmax.f32 %v403, 1e-16
  %v434 = vmax.f32 %v405, 1e-16
  %v435 = vmax.f32 %v407, 1e-16
  %v436 = vmax.f32 %v409, 1e-16
  %v437 = vmax.f32 %v411, 1e-16
  %v438 = vmax.f32 %v413, 1e-16
  %v439 = vmax.f32 %v415, 1e-16
  %v440 = vmax.f32 %v417, 1e-16
  %v441 = vmax.f32 %v419, 1e-16
  %v442 = vmax.f32 %v421, 1e-16
  %v443 = vmax.f32 %v423, 1e-16
  %v444 = vmax.f32 %v425, 1e-16
  %v445 = vmax.f32 %v427, 1e-16
  %v446 = vmax.f32 %v429, 1e-16
  %v447 = vmax.f32 %v431, 1e-16
  %v448 = vrcp.pop %v432
  %v449 = vmul.f32 %v432, %v448
  %v450 = vsub.f32 1.0, %v449
  %v451 = vmul.f32 %v448, %v450
  %v452 = vadd.f32 %v448, %v451
  %vm453 = vweird.f32 %v432
  %vm454 = vweird.f32 %v448
  %vm455 = vmor %vm453, %vm454
  %v456 = vsel %vm455, %v448, %v452
  %v457 = vand.u32 2147483647, %v432
  %vm458 = vcmp.eq.f32.partialorder %v457, 8.507059e+37
  %v459 = vand.u32 %v432, 2147483648
  %v460 = vor.u32 1.1754944e-38, %v459
  %v461 = vsel %vm458, %v460, %v456
  %v462 = vmul.f32 1.0, %v461
  %v463 = vrcp.pop %v433
  %v464 = vmul.f32 %v433, %v463
  %v465 = vsub.f32 1.0, %v464
  %v466 = vmul.f32 %v463, %v465
  %v467 = vadd.f32 %v463, %v466
  %vm468 = vweird.f32 %v433
  %vm469 = vweird.f32 %v463
  %vm470 = vmor %vm468, %vm469
  %v471 = vsel %vm470, %v463, %v467
  %v472 = vand.u32 2147483647, %v433
  %vm473 = vcmp.eq.f32.partialorder %v472, 8.507059e+37
  %v474 = vand.u32 %v433, 2147483648
  %v475 = vor.u32 1.1754944e-38, %v474
  %v476 = vsel %vm473, %v475, %v471
  %v477 = vmul.f32 1.0, %v476
  %v478 = vrcp.pop %v434
  %v479 = vmul.f32 %v434, %v478
  %v480 = vsub.f32 1.0, %v479
  %v481 = vmul.f32 %v478, %v480
  %v482 = vadd.f32 %v478, %v481
  %vm483 = vweird.f32 %v434
  %vm484 = vweird.f32 %v478
  %vm485 = vmor %vm483, %vm484
  %v486 = vsel %vm485, %v478, %v482
  %v487 = vand.u32 2147483647, %v434
  %vm488 = vcmp.eq.f32.partialorder %v487, 8.507059e+37
  %v489 = vand.u32 %v434, 2147483648
  %v490 = vor.u32 1.1754944e-38, %v489
  %v491 = vsel %vm488, %v490, %v486
  %v492 = vmul.f32 1.0, %v491
  %v493 = vrcp.pop %v435
  %v494 = vmul.f32 %v435, %v493
  %v495 = vsub.f32 1.0, %v494
  %v496 = vmul.f32 %v493, %v495
  %v497 = vadd.f32 %v493, %v496
  %vm498 = vweird.f32 %v435
  %vm499 = vweird.f32 %v493
  %vm500 = vmor %vm498, %vm499
  %v501 = vsel %vm500, %v493, %v497
  %v502 = vand.u32 2147483647, %v435
  %vm503 = vcmp.eq.f32.partialorder %v502, 8.507059e+37
  %v504 = vand.u32 %v435, 2147483648
  %v505 = vor.u32 1.1754944e-38, %v504
  %v506 = vsel %vm503, %v505, %v501
  %v507 = vmul.f32 1.0, %v506
  %v508 = vrcp.pop %v436
  %v509 = vmul.f32 %v436, %v508
  %v510 = vsub.f32 1.0, %v509
  %v511 = vmul.f32 %v508, %v510
  %v512 = vadd.f32 %v508, %v511
  %vm513 = vweird.f32 %v436
  %vm514 = vweird.f32 %v508
  %vm515 = vmor %vm513, %vm514
  %v516 = vsel %vm515, %v508, %v512
  %v517 = vand.u32 2147483647, %v436
  %vm518 = vcmp.eq.f32.partialorder %v517, 8.507059e+37
  %v519 = vand.u32 %v436, 2147483648
  %v520 = vor.u32 1.1754944e-38, %v519
  %v521 = vsel %vm518, %v520, %v516
  %v522 = vmul.f32 1.0, %v521
  %v523 = vrcp.pop %v437
  %v524 = vmul.f32 %v437, %v523
  %v525 = vsub.f32 1.0, %v524
  %v526 = vmul.f32 %v523, %v525
  %v527 = vadd.f32 %v523, %v526
  %vm528 = vweird.f32 %v437
  %vm529 = vweird.f32 %v523
  %vm530 = vmor %vm528, %vm529
  %v531 = vsel %vm530, %v523, %v527
  %v532 = vand.u32 2147483647, %v437
  %vm533 = vcmp.eq.f32.partialorder %v532, 8.507059e+37
  %v534 = vand.u32 %v437, 2147483648
  %v535 = vor.u32 1.1754944e-38, %v534
  %v536 = vsel %vm533, %v535, %v531
  %v537 = vmul.f32 1.0, %v536
  %v538 = vrcp.pop %v438
  %v539 = vmul.f32 %v438, %v538
  %v540 = vsub.f32 1.0, %v539
  %v541 = vmul.f32 %v538, %v540
  %v542 = vadd.f32 %v538, %v541
  %vm543 = vweird.f32 %v438
  %vm544 = vweird.f32 %v538
  %vm545 = vmor %vm543, %vm544
  %v546 = vsel %vm545, %v538, %v542
  %v547 = vand.u32 2147483647, %v438
  %vm548 = vcmp.eq.f32.partialorder %v547, 8.507059e+37
  %v549 = vand.u32 %v438, 2147483648
  %v550 = vor.u32 1.1754944e-38, %v549
  %v551 = vsel %vm548, %v550, %v546
  %v552 = vmul.f32 1.0, %v551
  %v553 = vrcp.pop %v439
  %v554 = vmul.f32 %v439, %v553
  %v555 = vsub.f32 1.0, %v554
  %v556 = vmul.f32 %v553, %v555
  %v557 = vadd.f32 %v553, %v556
  %vm558 = vweird.f32 %v439
  %vm559 = vweird.f32 %v553
  %vm560 = vmor %vm558, %vm559
  %v561 = vsel %vm560, %v553, %v557
  %v562 = vand.u32 2147483647, %v439
  %vm563 = vcmp.eq.f32.partialorder %v562, 8.507059e+37
  %v564 = vand.u32 %v439, 2147483648
  %v565 = vor.u32 1.1754944e-38, %v564
  %v566 = vsel %vm563, %v565, %v561
  %v567 = vmul.f32 1.0, %v566
  %v568 = vrcp.pop %v440
  %v569 = vmul.f32 %v440, %v568
  %v570 = vsub.f32 1.0, %v569
  %v571 = vmul.f32 %v568, %v570
  %v572 = vadd.f32 %v568, %v571
  %vm573 = vweird.f32 %v440
  %vm574 = vweird.f32 %v568
  %vm575 = vmor %vm573, %vm574
  %v576 = vsel %vm575, %v568, %v572
  %v577 = vand.u32 2147483647, %v440
  %vm578 = vcmp.eq.f32.partialorder %v577, 8.507059e+37
  %v579 = vand.u32 %v440, 2147483648
  %v580 = vor.u32 1.1754944e-38, %v579
  %v581 = vsel %vm578, %v580, %v576
  %v582 = vmul.f32 1.0, %v581
  %v583 = vrcp.pop %v441
  %v584 = vmul.f32 %v441, %v583
  %v585 = vsub.f32 1.0, %v584
  %v586 = vmul.f32 %v583, %v585
  %v587 = vadd.f32 %v583, %v586
  %vm588 = vweird.f32 %v441
  %vm589 = vweird.f32 %v583
  %vm590 = vmor %vm588, %vm589
  %v591 = vsel %vm590, %v583, %v587
  %v592 = vand.u32 2147483647, %v441
  %vm593 = vcmp.eq.f32.partialorder %v592, 8.507059e+37
  %v594 = vand.u32 %v441, 2147483648
  %v595 = vor.u32 1.1754944e-38, %v594
  %v596 = vsel %vm593, %v595, %v591
  %v597 = vmul.f32 1.0, %v596
  %v598 = vrcp.pop %v442
  %v599 = vmul.f32 %v442, %v598
  %v600 = vsub.f32 1.0, %v599
  %v601 = vmul.f32 %v598, %v600
  %v602 = vadd.f32 %v598, %v601
  %vm603 = vweird.f32 %v442
  %vm604 = vweird.f32 %v598
  %vm605 = vmor %vm603, %vm604
  %v606 = vsel %vm605, %v598, %v602
  %v607 = vand.u32 2147483647, %v442
  %vm608 = vcmp.eq.f32.partialorder %v607, 8.507059e+37
  %v609 = vand.u32 %v442, 2147483648
  %v610 = vor.u32 1.1754944e-38, %v609
  %v611 = vsel %vm608, %v610, %v606
  %v612 = vmul.f32 1.0, %v611
  %v613 = vrcp.pop %v443
  %v614 = vmul.f32 %v443, %v613
  %v615 = vsub.f32 1.0, %v614
  %v616 = vmul.f32 %v613, %v615
  %v617 = vadd.f32 %v613, %v616
  %vm618 = vweird.f32 %v443
  %vm619 = vweird.f32 %v613
  %vm620 = vmor %vm618, %vm619
  %v621 = vsel %vm620, %v613, %v617
  %v622 = vand.u32 2147483647, %v443
  %vm623 = vcmp.eq.f32.partialorder %v622, 8.507059e+37
  %v624 = vand.u32 %v443, 2147483648
  %v625 = vor.u32 1.1754944e-38, %v624
  %v626 = vsel %vm623, %v625, %v621
  %v627 = vmul.f32 1.0, %v626
  %v628 = vrcp.pop %v444
  %v629 = vmul.f32 %v444, %v628
  %v630 = vsub.f32 1.0, %v629
  %v631 = vmul.f32 %v628, %v630
  %v632 = vadd.f32 %v628, %v631
  %vm633 = vweird.f32 %v444
  %vm634 = vweird.f32 %v628
  %vm635 = vmor %vm633, %vm634
  %v636 = vsel %vm635, %v628, %v632
  %v637 = vand.u32 2147483647, %v444
  %vm638 = vcmp.eq.f32.partialorder %v637, 8.507059e+37
  %v639 = vand.u32 %v444, 2147483648
  %v640 = vor.u32 1.1754944e-38, %v639
  %v641 = vsel %vm638, %v640, %v636
  %v642 = vmul.f32 1.0, %v641
  %v643 = vrcp.pop %v445
  %v644 = vmul.f32 %v445, %v643
  %v645 = vsub.f32 1.0, %v644
  %v646 = vmul.f32 %v643, %v645
  %v647 = vadd.f32 %v643, %v646
  %vm648 = vweird.f32 %v445
  %vm649 = vweird.f32 %v643
  %vm650 = vmor %vm648, %vm649
  %v651 = vsel %vm650, %v643, %v647
  %v652 = vand.u32 2147483647, %v445
  %vm653 = vcmp.eq.f32.partialorder %v652, 8.507059e+37
  %v654 = vand.u32 %v445, 2147483648
  %v655 = vor.u32 1.1754944e-38, %v654
  %v656 = vsel %vm653, %v655, %v651
  %v657 = vmul.f32 1.0, %v656
  %v658 = vrcp.pop %v446
  %v659 = vmul.f32 %v446, %v658
  %v660 = vsub.f32 1.0, %v659
  %v661 = vmul.f32 %v658, %v660
  %v662 = vadd.f32 %v658, %v661
  %vm663 = vweird.f32 %v446
  %vm664 = vweird.f32 %v658
  %vm665 = vmor %vm663, %vm664
  %v666 = vsel %vm665, %v658, %v662
  %v667 = vand.u32 2147483647, %v446
  %vm668 = vcmp.eq.f32.partialorder %v667, 8.507059e+37
  %v669 = vand.u32 %v446, 2147483648
  %v670 = vor.u32 1.1754944e-38, %v669
  %v671 = vsel %vm668, %v670, %v666
  %v672 = vmul.f32 1.0, %v671
  %v673 = vrcp.pop %v447
  %v674 = vmul.f32 %v447, %v673
  %v675 = vsub.f32 1.0, %v674
  %v676 = vmul.f32 %v673, %v675
  %v677 = vadd.f32 %v673, %v676
  %vm678 = vweird.f32 %v447
  %vm679 = vweird.f32 %v673
  %vm680 = vmor %vm678, %vm679
  %v681 = vsel %vm680, %v673, %v677
  %v682 = vand.u32 2147483647, %v447
  %vm683 = vcmp.eq.f32.partialorder %v682, 8.507059e+37
  %v684 = vand.u32 %v447, 2147483648
  %v685 = vor.u32 1.1754944e-38, %v684
  %v686 = vsel %vm683, %v685, %v681
  %v687 = vmul.f32 1.0, %v686
  %vm688 = vcmp.eq.f32.partialorder %v382, %v401
  %vm689 = vcmp.eq.f32.partialorder %v383, %v403
  %vm690 = vcmp.eq.f32.partialorder %v384, %v405
  %vm691 = vcmp.eq.f32.partialorder %v385, %v407
  %vm692 = vcmp.eq.f32.partialorder %v386, %v409
  %vm693 = vcmp.eq.f32.partialorder %v387, %v411
  %vm694 = vcmp.eq.f32.partialorder %v388, %v413
  %vm695 = vcmp.eq.f32.partialorder %v389, %v415
  %vm696 = vcmp.eq.f32.partialorder %v390, %v417
  %vm697 = vcmp.eq.f32.partialorder %v391, %v419
  %vm698 = vcmp.eq.f32.partialorder %v392, %v421
  %vm699 = vcmp.eq.f32.partialorder %v393, %v423
  %vm700 = vcmp.eq.f32.partialorder %v394, %v425
  %vm701 = vcmp.eq.f32.partialorder %v395, %v427
  %vm702 = vcmp.eq.f32.partialorder %v396, %v429
  %vm703 = vcmp.eq.f32.partialorder %v397, %v431
  %v704 = vsel %vm688, %v399, 128
  %v705 = vsel %vm689, %v399, 128
  %v706 = vsel %vm690, %v399, 128
  %v707 = vsel %vm691, %v399, 128
  %v708 = vsel %vm692, %v399, 128
  %v709 = vsel %vm693, %v399, 128
  %v710 = vsel %vm694, %v399, 128
  %v711 = vsel %vm695, %v399, 128
  %v712 = vsel %vm696, %v399, 128
  %v713 = vsel %vm697, %v399, 128
  %v714 = vsel %vm698, %v399, 128
  %v715 = vsel %vm699, %v399, 128
  %v716 = vsel %vm700, %v399, 128
  %v717 = vsel %vm701, %v399, 128
  %v718 = vsel %vm702, %v399, 128
  %v719 = vsel %vm703, %v399, 128
  %v720 = vand.u32 %v704, 65535
  %v721 = vshra.s32 %v704, 16
  %v722 = vcvt.s32.f32 %v720
  %v723 = vcvt.s32.f32 %v721
  %724 = vmin.xlane.f32.xlu0 %v723
  %v725 = vpop.xlane.xlu0 %724
  %vm726 = vcmp.eq.f32.partialorder %v723, %v725
  %v727 = vsel %vm726, %v722, inf
  %728 = vmin.xlane.f32.xlu0 %v727
  %v729 = vpop.xlane.xlu0 %728
  %v730 = vcvt.f32.s32 %v729
  %v731 = vcvt.f32.s32 %v725
  %v732 = vshll.u32 %v731, 16
  %v733 = vadd.s32 %v732, %v730
  %v734 = vand.u32 %v705, 65535
  %v735 = vshra.s32 %v705, 16
  %v736 = vcvt.s32.f32 %v734
  %v737 = vcvt.s32.f32 %v735
  %738 = vmin.xlane.f32.xlu0 %v737
  %v739 = vpop.xlane.xlu0 %738
  %vm740 = vcmp.eq.f32.partialorder %v737, %v739
  %v741 = vsel %vm740, %v736, inf
  %742 = vmin.xlane.f32.xlu0 %v741
  %v743 = vpop.xlane.xlu0 %742
  %v744 = vcvt.f32.s32 %v743
  %v745 = vcvt.f32.s32 %v739
  %v746 = vshll.u32 %v745, 16
  %v747 = vadd.s32 %v746, %v744
  %v748 = vand.u32 %v706, 65535
  %v749 = vshra.s32 %v706, 16
  %v750 = vcvt.s32.f32 %v748
  %v751 = vcvt.s32.f32 %v749
  %752 = vmin.xlane.f32.xlu0 %v751
  %v753 = vpop.xlane.xlu0 %752
  %vm754 = vcmp.eq.f32.partialorder %v751, %v753
  %v755 = vsel %vm754, %v750, inf
  %756 = vmin.xlane.f32.xlu0 %v755
  %v757 = vpop.xlane.xlu0 %756
  %v758 = vcvt.f32.s32 %v757
  %v759 = vcvt.f32.s32 %v753
  %v760 = vshll.u32 %v759, 16
  %v761 = vadd.s32 %v760, %v758
  %v762 = vand.u32 %v707, 65535
  %v763 = vshra.s32 %v707, 16
  %v764 = vcvt.s32.f32 %v762
  %v765 = vcvt.s32.f32 %v763
  %766 = vmin.xlane.f32.xlu0 %v765
  %v767 = vpop.xlane.xlu0 %766
  %vm768 = vcmp.eq.f32.partialorder %v765, %v767
  %v769 = vsel %vm768, %v764, inf
  %770 = vmin.xlane.f32.xlu0 %v769
  %v771 = vpop.xlane.xlu0 %770
  %v772 = vcvt.f32.s32 %v771
  %v773 = vcvt.f32.s32 %v767
  %v774 = vshll.u32 %v773, 16
  %v775 = vadd.s32 %v774, %v772
  %v776 = vand.u32 %v708, 65535
  %v777 = vshra.s32 %v708, 16
  %v778 = vcvt.s32.f32 %v776
  %v779 = vcvt.s32.f32 %v777
  %780 = vmin.xlane.f32.xlu0 %v779
  %v781 = vpop.xlane.xlu0 %780
  %vm782 = vcmp.eq.f32.partialorder %v779, %v781
  %v783 = vsel %vm782, %v778, inf
  %784 = vmin.xlane.f32.xlu0 %v783
  %v785 = vpop.xlane.xlu0 %784
  %v786 = vcvt.f32.s32 %v785
  %v787 = vcvt.f32.s32 %v781
  %v788 = vshll.u32 %v787, 16
  %v789 = vadd.s32 %v788, %v786
  %v790 = vand.u32 %v709, 65535
  %v791 = vshra.s32 %v709, 16
  %v792 = vcvt.s32.f32 %v790
  %v793 = vcvt.s32.f32 %v791
  %794 = vmin.xlane.f32.xlu0 %v793
  %v795 = vpop.xlane.xlu0 %794
  %vm796 = vcmp.eq.f32.partialorder %v793, %v795
  %v797 = vsel %vm796, %v792, inf
  %798 = vmin.xlane.f32.xlu0 %v797
  %v799 = vpop.xlane.xlu0 %798
  %v800 = vcvt.f32.s32 %v799
  %v801 = vcvt.f32.s32 %v795
  %v802 = vshll.u32 %v801, 16
  %v803 = vadd.s32 %v802, %v800
  %v804 = vand.u32 %v710, 65535
  %v805 = vshra.s32 %v710, 16
  %v806 = vcvt.s32.f32 %v804
  %v807 = vcvt.s32.f32 %v805
  %808 = vmin.xlane.f32.xlu0 %v807
  %v809 = vpop.xlane.xlu0 %808
  %vm810 = vcmp.eq.f32.partialorder %v807, %v809
  %v811 = vsel %vm810, %v806, inf
  %812 = vmin.xlane.f32.xlu0 %v811
  %v813 = vpop.xlane.xlu0 %812
  %v814 = vcvt.f32.s32 %v813
  %v815 = vcvt.f32.s32 %v809
  %v816 = vshll.u32 %v815, 16
  %v817 = vadd.s32 %v816, %v814
  %v818 = vand.u32 %v711, 65535
  %v819 = vshra.s32 %v711, 16
  %v820 = vcvt.s32.f32 %v818
  %v821 = vcvt.s32.f32 %v819
  %822 = vmin.xlane.f32.xlu0 %v821
  %v823 = vpop.xlane.xlu0 %822
  %vm824 = vcmp.eq.f32.partialorder %v821, %v823
  %v825 = vsel %vm824, %v820, inf
  %826 = vmin.xlane.f32.xlu0 %v825
  %v827 = vpop.xlane.xlu0 %826
  %v828 = vcvt.f32.s32 %v827
  %v829 = vcvt.f32.s32 %v823
  %v830 = vshll.u32 %v829, 16
  %v831 = vadd.s32 %v830, %v828
  %v832 = vand.u32 %v712, 65535
  %v833 = vshra.s32 %v712, 16
  %v834 = vcvt.s32.f32 %v832
  %v835 = vcvt.s32.f32 %v833
  %836 = vmin.xlane.f32.xlu0 %v835
  %v837 = vpop.xlane.xlu0 %836
  %vm838 = vcmp.eq.f32.partialorder %v835, %v837
  %v839 = vsel %vm838, %v834, inf
  %840 = vmin.xlane.f32.xlu0 %v839
  %v841 = vpop.xlane.xlu0 %840
  %v842 = vcvt.f32.s32 %v841
  %v843 = vcvt.f32.s32 %v837
  %v844 = vshll.u32 %v843, 16
  %v845 = vadd.s32 %v844, %v842
  %v846 = vand.u32 %v713, 65535
  %v847 = vshra.s32 %v713, 16
  %v848 = vcvt.s32.f32 %v846
  %v849 = vcvt.s32.f32 %v847
  %850 = vmin.xlane.f32.xlu0 %v849
  %v851 = vpop.xlane.xlu0 %850
  %vm852 = vcmp.eq.f32.partialorder %v849, %v851
  %v853 = vsel %vm852, %v848, inf
  %854 = vmin.xlane.f32.xlu0 %v853
  %v855 = vpop.xlane.xlu0 %854
  %v856 = vcvt.f32.s32 %v855
  %v857 = vcvt.f32.s32 %v851
  %v858 = vshll.u32 %v857, 16
  %v859 = vadd.s32 %v858, %v856
  %v860 = vand.u32 %v714, 65535
  %v861 = vshra.s32 %v714, 16
  %v862 = vcvt.s32.f32 %v860
  %v863 = vcvt.s32.f32 %v861
  %864 = vmin.xlane.f32.xlu0 %v863
  %v865 = vpop.xlane.xlu0 %864
  %vm866 = vcmp.eq.f32.partialorder %v863, %v865
  %v867 = vsel %vm866, %v862, inf
  %868 = vmin.xlane.f32.xlu0 %v867
  %v869 = vpop.xlane.xlu0 %868
  %v870 = vcvt.f32.s32 %v869
  %v871 = vcvt.f32.s32 %v865
  %v872 = vshll.u32 %v871, 16
  %v873 = vadd.s32 %v872, %v870
  %v874 = vand.u32 %v715, 65535
  %v875 = vshra.s32 %v715, 16
  %v876 = vcvt.s32.f32 %v874
  %v877 = vcvt.s32.f32 %v875
  %878 = vmin.xlane.f32.xlu0 %v877
  %v879 = vpop.xlane.xlu0 %878
  %vm880 = vcmp.eq.f32.partialorder %v877, %v879
  %v881 = vsel %vm880, %v876, inf
  %882 = vmin.xlane.f32.xlu0 %v881
  %v883 = vpop.xlane.xlu0 %882
  %v884 = vcvt.f32.s32 %v883
  %v885 = vcvt.f32.s32 %v879
  %v886 = vshll.u32 %v885, 16
  %v887 = vadd.s32 %v886, %v884
  %v888 = vand.u32 %v716, 65535
  %v889 = vshra.s32 %v716, 16
  %v890 = vcvt.s32.f32 %v888
  %v891 = vcvt.s32.f32 %v889
  %892 = vmin.xlane.f32.xlu0 %v891
  %v893 = vpop.xlane.xlu0 %892
  %vm894 = vcmp.eq.f32.partialorder %v891, %v893
  %v895 = vsel %vm894, %v890, inf
  %896 = vmin.xlane.f32.xlu0 %v895
  %v897 = vpop.xlane.xlu0 %896
  %v898 = vcvt.f32.s32 %v897
  %v899 = vcvt.f32.s32 %v893
  %v900 = vshll.u32 %v899, 16
  %v901 = vadd.s32 %v900, %v898
  %v902 = vand.u32 %v717, 65535
  %v903 = vshra.s32 %v717, 16
  %v904 = vcvt.s32.f32 %v902
  %v905 = vcvt.s32.f32 %v903
  %906 = vmin.xlane.f32.xlu0 %v905
  %v907 = vpop.xlane.xlu0 %906
  %vm908 = vcmp.eq.f32.partialorder %v905, %v907
  %v909 = vsel %vm908, %v904, inf
  %910 = vmin.xlane.f32.xlu0 %v909
  %v911 = vpop.xlane.xlu0 %910
  %v912 = vcvt.f32.s32 %v911
  %v913 = vcvt.f32.s32 %v907
  %v914 = vshll.u32 %v913, 16
  %v915 = vadd.s32 %v914, %v912
  %v916 = vand.u32 %v718, 65535
  %v917 = vshra.s32 %v718, 16
  %v918 = vcvt.s32.f32 %v916
  %v919 = vcvt.s32.f32 %v917
  %920 = vmin.xlane.f32.xlu0 %v919
  %v921 = vpop.xlane.xlu0 %920
  %vm922 = vcmp.eq.f32.partialorder %v919, %v921
  %v923 = vsel %vm922, %v918, inf
  %924 = vmin.xlane.f32.xlu0 %v923
  %v925 = vpop.xlane.xlu0 %924
  %v926 = vcvt.f32.s32 %v925
  %v927 = vcvt.f32.s32 %v921
  %v928 = vshll.u32 %v927, 16
  %v929 = vadd.s32 %v928, %v926
  %v930 = vand.u32 %v719, 65535
  %v931 = vshra.s32 %v719, 16
  %v932 = vcvt.s32.f32 %v930
  %v933 = vcvt.s32.f32 %v931
  %934 = vmin.xlane.f32.xlu0 %v933
  %v935 = vpop.xlane.xlu0 %934
  %vm936 = vcmp.eq.f32.partialorder %v933, %v935
  %v937 = vsel %vm936, %v932, inf
  %938 = vmin.xlane.f32.xlu0 %v937
  %v939 = vpop.xlane.xlu0 %938
  %v940 = vcvt.f32.s32 %v939
  %v941 = vcvt.f32.s32 %v935
  %v942 = vshll.u32 %v941, 16
  %v943 = vadd.s32 %v942, %v940
  %vm944 = vcmp.eq.s32.totalorder %v399, %v733
  %vm945 = vcmp.eq.s32.totalorder %v399, %v747
  %vm946 = vcmp.eq.s32.totalorder %v399, %v761
  %vm947 = vcmp.eq.s32.totalorder %v399, %v775
  %vm948 = vcmp.eq.s32.totalorder %v399, %v789
  %vm949 = vcmp.eq.s32.totalorder %v399, %v803
  %vm950 = vcmp.eq.s32.totalorder %v399, %v817
  %vm951 = vcmp.eq.s32.totalorder %v399, %v831
  %vm952 = vcmp.eq.s32.totalorder %v399, %v845
  %vm953 = vcmp.eq.s32.totalorder %v399, %v859
  %vm954 = vcmp.eq.s32.totalorder %v399, %v873
  %vm955 = vcmp.eq.s32.totalorder %v399, %v887
  %vm956 = vcmp.eq.s32.totalorder %v399, %v901
  %vm957 = vcmp.eq.s32.totalorder %v399, %v915
  %vm958 = vcmp.eq.s32.totalorder %v399, %v929
  %vm959 = vcmp.eq.s32.totalorder %v399, %v943
  %v960 = vsel %vm944, %v462, 0.0
  %v961 = vsel %vm945, %v477, 0.0
  %v962 = vsel %vm946, %v492, 0.0
  %v963 = vsel %vm947, %v507, 0.0
  %v964 = vsel %vm948, %v522, 0.0
  %v965 = vsel %vm949, %v537, 0.0
  %v966 = vsel %vm950, %v552, 0.0
  %v967 = vsel %vm951, %v567, 0.0
  %v968 = vsel %vm952, %v582, 0.0
  %v969 = vsel %vm953, %v597, 0.0
  %v970 = vsel %vm954, %v612, 0.0
  %v971 = vsel %vm955, %v627, 0.0
  %v972 = vsel %vm956, %v642, 0.0
  %v973 = vsel %vm957, %v657, 0.0
  %v974 = vsel %vm958, %v672, 0.0
  %v975 = vsel %vm959, %v687, 0.0
  %v976 = vadd.f32 %v462, 0.0
  %v977 = vadd.f32 %v477, 0.0
  %v978 = vadd.f32 %v492, 0.0
  %v979 = vadd.f32 %v507, 0.0
  %v980 = vadd.f32 %v522, 0.0
  %v981 = vadd.f32 %v537, 0.0
  %v982 = vadd.f32 %v552, 0.0
  %v983 = vadd.f32 %v567, 0.0
  %v984 = vadd.f32 %v582, 0.0
  %v985 = vadd.f32 %v597, 0.0
  %v986 = vadd.f32 %v612, 0.0
  %v987 = vadd.f32 %v627, 0.0
  %v988 = vadd.f32 %v642, 0.0
  %v989 = vadd.f32 %v657, 0.0
  %v990 = vadd.f32 %v672, 0.0
  %v991 = vadd.f32 %v687, 0.0
  %v992 = vsel %vm944, inf, %v382
  %v993 = vsel %vm945, inf, %v383
  %v994 = vsel %vm946, inf, %v384
  %v995 = vsel %vm947, inf, %v385
  %v996 = vsel %vm948, inf, %v386
  %v997 = vsel %vm949, inf, %v387
  %v998 = vsel %vm950, inf, %v388
  %v999 = vsel %vm951, inf, %v389
  %v1000 = vsel %vm952, inf, %v390
  %v1001 = vsel %vm953, inf, %v391
  %v1002 = vsel %vm954, inf, %v392
  %v1003 = vsel %vm955, inf, %v393
  %v1004 = vsel %vm956, inf, %v394
  %v1005 = vsel %vm957, inf, %v395
  %v1006 = vsel %vm958, inf, %v396
  %v1007 = vsel %vm959, inf, %v397
  %1008 = vmin.xlane.f32.xlu0 %v992
  %v1009 = vpop.xlane.xlu0 %1008
  %1010 = vmin.xlane.f32.xlu0 %v993
  %v1011 = vpop.xlane.xlu0 %1010
  %1012 = vmin.xlane.f32.xlu0 %v994
  %v1013 = vpop.xlane.xlu0 %1012
  %1014 = vmin.xlane.f32.xlu0 %v995
  %v1015 = vpop.xlane.xlu0 %1014
  %1016 = vmin.xlane.f32.xlu0 %v996
  %v1017 = vpop.xlane.xlu0 %1016
  %1018 = vmin.xlane.f32.xlu0 %v997
  %v1019 = vpop.xlane.xlu0 %1018
  %1020 = vmin.xlane.f32.xlu0 %v998
  %v1021 = vpop.xlane.xlu0 %1020
  %1022 = vmin.xlane.f32.xlu0 %v999
  %v1023 = vpop.xlane.xlu0 %1022
  %1024 = vmin.xlane.f32.xlu0 %v1000
  %v1025 = vpop.xlane.xlu0 %1024
  %1026 = vmin.xlane.f32.xlu0 %v1001
  %v1027 = vpop.xlane.xlu0 %1026
  %1028 = vmin.xlane.f32.xlu0 %v1002
  %v1029 = vpop.xlane.xlu0 %1028
  %1030 = vmin.xlane.f32.xlu0 %v1003
  %v1031 = vpop.xlane.xlu0 %1030
  %1032 = vmin.xlane.f32.xlu0 %v1004
  %v1033 = vpop.xlane.xlu0 %1032
  %1034 = vmin.xlane.f32.xlu0 %v1005
  %v1035 = vpop.xlane.xlu0 %1034
  %1036 = vmin.xlane.f32.xlu0 %v1006
  %v1037 = vpop.xlane.xlu0 %1036
  %1038 = vmin.xlane.f32.xlu0 %v1007
  %v1039 = vpop.xlane.xlu0 %1038
  %v1040 = vmax.f32 %v1009, 1e-16
  %v1041 = vmax.f32 %v1011, 1e-16
  %v1042 = vmax.f32 %v1013, 1e-16
  %v1043 = vmax.f32 %v1015, 1e-16
  %v1044 = vmax.f32 %v1017, 1e-16
  %v1045 = vmax.f32 %v1019, 1e-16
  %v1046 = vmax.f32 %v1021, 1e-16
  %v1047 = vmax.f32 %v1023, 1e-16
  %v1048 = vmax.f32 %v1025, 1e-16
  %v1049 = vmax.f32 %v1027, 1e-16
  %v1050 = vmax.f32 %v1029, 1e-16
  %v1051 = vmax.f32 %v1031, 1e-16
  %v1052 = vmax.f32 %v1033, 1e-16
  %v1053 = vmax.f32 %v1035, 1e-16
  %v1054 = vmax.f32 %v1037, 1e-16
  %v1055 = vmax.f32 %v1039, 1e-16
  %v1056 = vrcp.pop %v1040
  %v1057 = vmul.f32 %v1040, %v1056
  %v1058 = vsub.f32 1.0, %v1057
  %v1059 = vmul.f32 %v1056, %v1058
  %v1060 = vadd.f32 %v1056, %v1059
  %vm1061 = vweird.f32 %v1040
  %vm1062 = vweird.f32 %v1056
  %vm1063 = vmor %vm1061, %vm1062
  %v1064 = vsel %vm1063, %v1056, %v1060
  %v1065 = vand.u32 2147483647, %v1040
  %vm1066 = vcmp.eq.f32.partialorder %v1065, 8.507059e+37
  %v1067 = vand.u32 %v1040, 2147483648
  %v1068 = vor.u32 1.1754944e-38, %v1067
  %v1069 = vsel %vm1066, %v1068, %v1064
  %v1070 = vmul.f32 1.0, %v1069
  %v1071 = vrcp.pop %v1041
  %v1072 = vmul.f32 %v1041, %v1071
  %v1073 = vsub.f32 1.0, %v1072
  %v1074 = vmul.f32 %v1071, %v1073
  %v1075 = vadd.f32 %v1071, %v1074
  %vm1076 = vweird.f32 %v1041
  %vm1077 = vweird.f32 %v1071
  %vm1078 = vmor %vm1076, %vm1077
  %v1079 = vsel %vm1078, %v1071, %v1075
  %v1080 = vand.u32 2147483647, %v1041
  %vm1081 = vcmp.eq.f32.partialorder %v1080, 8.507059e+37
  %v1082 = vand.u32 %v1041, 2147483648
  %v1083 = vor.u32 1.1754944e-38, %v1082
  %v1084 = vsel %vm1081, %v1083, %v1079
  %v1085 = vmul.f32 1.0, %v1084
  %v1086 = vrcp.pop %v1042
  %v1087 = vmul.f32 %v1042, %v1086
  %v1088 = vsub.f32 1.0, %v1087
  %v1089 = vmul.f32 %v1086, %v1088
  %v1090 = vadd.f32 %v1086, %v1089
  %vm1091 = vweird.f32 %v1042
  %vm1092 = vweird.f32 %v1086
  %vm1093 = vmor %vm1091, %vm1092
  %v1094 = vsel %vm1093, %v1086, %v1090
  %v1095 = vand.u32 2147483647, %v1042
  %vm1096 = vcmp.eq.f32.partialorder %v1095, 8.507059e+37
  %v1097 = vand.u32 %v1042, 2147483648
  %v1098 = vor.u32 1.1754944e-38, %v1097
  %v1099 = vsel %vm1096, %v1098, %v1094
  %v1100 = vmul.f32 1.0, %v1099
  %v1101 = vrcp.pop %v1043
  %v1102 = vmul.f32 %v1043, %v1101
  %v1103 = vsub.f32 1.0, %v1102
  %v1104 = vmul.f32 %v1101, %v1103
  %v1105 = vadd.f32 %v1101, %v1104
  %vm1106 = vweird.f32 %v1043
  %vm1107 = vweird.f32 %v1101
  %vm1108 = vmor %vm1106, %vm1107
  %v1109 = vsel %vm1108, %v1101, %v1105
  %v1110 = vand.u32 2147483647, %v1043
  %vm1111 = vcmp.eq.f32.partialorder %v1110, 8.507059e+37
  %v1112 = vand.u32 %v1043, 2147483648
  %v1113 = vor.u32 1.1754944e-38, %v1112
  %v1114 = vsel %vm1111, %v1113, %v1109
  %v1115 = vmul.f32 1.0, %v1114
  %v1116 = vrcp.pop %v1044
  %v1117 = vmul.f32 %v1044, %v1116
  %v1118 = vsub.f32 1.0, %v1117
  %v1119 = vmul.f32 %v1116, %v1118
  %v1120 = vadd.f32 %v1116, %v1119
  %vm1121 = vweird.f32 %v1044
  %vm1122 = vweird.f32 %v1116
  %vm1123 = vmor %vm1121, %vm1122
  %v1124 = vsel %vm1123, %v1116, %v1120
  %v1125 = vand.u32 2147483647, %v1044
  %vm1126 = vcmp.eq.f32.partialorder %v1125, 8.507059e+37
  %v1127 = vand.u32 %v1044, 2147483648
  %v1128 = vor.u32 1.1754944e-38, %v1127
  %v1129 = vsel %vm1126, %v1128, %v1124
  %v1130 = vmul.f32 1.0, %v1129
  %v1131 = vrcp.pop %v1045
  %v1132 = vmul.f32 %v1045, %v1131
  %v1133 = vsub.f32 1.0, %v1132
  %v1134 = vmul.f32 %v1131, %v1133
  %v1135 = vadd.f32 %v1131, %v1134
  %vm1136 = vweird.f32 %v1045
  %vm1137 = vweird.f32 %v1131
  %vm1138 = vmor %vm1136, %vm1137
  %v1139 = vsel %vm1138, %v1131, %v1135
  %v1140 = vand.u32 2147483647, %v1045
  %vm1141 = vcmp.eq.f32.partialorder %v1140, 8.507059e+37
  %v1142 = vand.u32 %v1045, 2147483648
  %v1143 = vor.u32 1.1754944e-38, %v1142
  %v1144 = vsel %vm1141, %v1143, %v1139
  %v1145 = vmul.f32 1.0, %v1144
  %v1146 = vrcp.pop %v1046
  %v1147 = vmul.f32 %v1046, %v1146
  %v1148 = vsub.f32 1.0, %v1147
  %v1149 = vmul.f32 %v1146, %v1148
  %v1150 = vadd.f32 %v1146, %v1149
  %vm1151 = vweird.f32 %v1046
  %vm1152 = vweird.f32 %v1146
  %vm1153 = vmor %vm1151, %vm1152
  %v1154 = vsel %vm1153, %v1146, %v1150
  %v1155 = vand.u32 2147483647, %v1046
  %vm1156 = vcmp.eq.f32.partialorder %v1155, 8.507059e+37
  %v1157 = vand.u32 %v1046, 2147483648
  %v1158 = vor.u32 1.1754944e-38, %v1157
  %v1159 = vsel %vm1156, %v1158, %v1154
  %v1160 = vmul.f32 1.0, %v1159
  %v1161 = vrcp.pop %v1047
  %v1162 = vmul.f32 %v1047, %v1161
  %v1163 = vsub.f32 1.0, %v1162
  %v1164 = vmul.f32 %v1161, %v1163
  %v1165 = vadd.f32 %v1161, %v1164
  %vm1166 = vweird.f32 %v1047
  %vm1167 = vweird.f32 %v1161
  %vm1168 = vmor %vm1166, %vm1167
  %v1169 = vsel %vm1168, %v1161, %v1165
  %v1170 = vand.u32 2147483647, %v1047
  %vm1171 = vcmp.eq.f32.partialorder %v1170, 8.507059e+37
  %v1172 = vand.u32 %v1047, 2147483648
  %v1173 = vor.u32 1.1754944e-38, %v1172
  %v1174 = vsel %vm1171, %v1173, %v1169
  %v1175 = vmul.f32 1.0, %v1174
  %v1176 = vrcp.pop %v1048
  %v1177 = vmul.f32 %v1048, %v1176
  %v1178 = vsub.f32 1.0, %v1177
  %v1179 = vmul.f32 %v1176, %v1178
  %v1180 = vadd.f32 %v1176, %v1179
  %vm1181 = vweird.f32 %v1048
  %vm1182 = vweird.f32 %v1176
  %vm1183 = vmor %vm1181, %vm1182
  %v1184 = vsel %vm1183, %v1176, %v1180
  %v1185 = vand.u32 2147483647, %v1048
  %vm1186 = vcmp.eq.f32.partialorder %v1185, 8.507059e+37
  %v1187 = vand.u32 %v1048, 2147483648
  %v1188 = vor.u32 1.1754944e-38, %v1187
  %v1189 = vsel %vm1186, %v1188, %v1184
  %v1190 = vmul.f32 1.0, %v1189
  %v1191 = vrcp.pop %v1049
  %v1192 = vmul.f32 %v1049, %v1191
  %v1193 = vsub.f32 1.0, %v1192
  %v1194 = vmul.f32 %v1191, %v1193
  %v1195 = vadd.f32 %v1191, %v1194
  %vm1196 = vweird.f32 %v1049
  %vm1197 = vweird.f32 %v1191
  %vm1198 = vmor %vm1196, %vm1197
  %v1199 = vsel %vm1198, %v1191, %v1195
  %v1200 = vand.u32 2147483647, %v1049
  %vm1201 = vcmp.eq.f32.partialorder %v1200, 8.507059e+37
  %v1202 = vand.u32 %v1049, 2147483648
  %v1203 = vor.u32 1.1754944e-38, %v1202
  %v1204 = vsel %vm1201, %v1203, %v1199
  %v1205 = vmul.f32 1.0, %v1204
  %v1206 = vrcp.pop %v1050
  %v1207 = vmul.f32 %v1050, %v1206
  %v1208 = vsub.f32 1.0, %v1207
  %v1209 = vmul.f32 %v1206, %v1208
  %v1210 = vadd.f32 %v1206, %v1209
  %vm1211 = vweird.f32 %v1050
  %vm1212 = vweird.f32 %v1206
  %vm1213 = vmor %vm1211, %vm1212
  %v1214 = vsel %vm1213, %v1206, %v1210
  %v1215 = vand.u32 2147483647, %v1050
  %vm1216 = vcmp.eq.f32.partialorder %v1215, 8.507059e+37
  %v1217 = vand.u32 %v1050, 2147483648
  %v1218 = vor.u32 1.1754944e-38, %v1217
  %v1219 = vsel %vm1216, %v1218, %v1214
  %v1220 = vmul.f32 1.0, %v1219
  %v1221 = vrcp.pop %v1051
  %v1222 = vmul.f32 %v1051, %v1221
  %v1223 = vsub.f32 1.0, %v1222
  %v1224 = vmul.f32 %v1221, %v1223
  %v1225 = vadd.f32 %v1221, %v1224
  %vm1226 = vweird.f32 %v1051
  %vm1227 = vweird.f32 %v1221
  %vm1228 = vmor %vm1226, %vm1227
  %v1229 = vsel %vm1228, %v1221, %v1225
  %v1230 = vand.u32 2147483647, %v1051
  %vm1231 = vcmp.eq.f32.partialorder %v1230, 8.507059e+37
  %v1232 = vand.u32 %v1051, 2147483648
  %v1233 = vor.u32 1.1754944e-38, %v1232
  %v1234 = vsel %vm1231, %v1233, %v1229
  %v1235 = vmul.f32 1.0, %v1234
  %v1236 = vrcp.pop %v1052
  %v1237 = vmul.f32 %v1052, %v1236
  %v1238 = vsub.f32 1.0, %v1237
  %v1239 = vmul.f32 %v1236, %v1238
  %v1240 = vadd.f32 %v1236, %v1239
  %vm1241 = vweird.f32 %v1052
  %vm1242 = vweird.f32 %v1236
  %vm1243 = vmor %vm1241, %vm1242
  %v1244 = vsel %vm1243, %v1236, %v1240
  %v1245 = vand.u32 2147483647, %v1052
  %vm1246 = vcmp.eq.f32.partialorder %v1245, 8.507059e+37
  %v1247 = vand.u32 %v1052, 2147483648
  %v1248 = vor.u32 1.1754944e-38, %v1247
  %v1249 = vsel %vm1246, %v1248, %v1244
  %v1250 = vmul.f32 1.0, %v1249
  %v1251 = vrcp.pop %v1053
  %v1252 = vmul.f32 %v1053, %v1251
  %v1253 = vsub.f32 1.0, %v1252
  %v1254 = vmul.f32 %v1251, %v1253
  %v1255 = vadd.f32 %v1251, %v1254
  %vm1256 = vweird.f32 %v1053
  %vm1257 = vweird.f32 %v1251
  %vm1258 = vmor %vm1256, %vm1257
  %v1259 = vsel %vm1258, %v1251, %v1255
  %v1260 = vand.u32 2147483647, %v1053
  %vm1261 = vcmp.eq.f32.partialorder %v1260, 8.507059e+37
  %v1262 = vand.u32 %v1053, 2147483648
  %v1263 = vor.u32 1.1754944e-38, %v1262
  %v1264 = vsel %vm1261, %v1263, %v1259
  %v1265 = vmul.f32 1.0, %v1264
  %v1266 = vrcp.pop %v1054
  %v1267 = vmul.f32 %v1054, %v1266
  %v1268 = vsub.f32 1.0, %v1267
  %v1269 = vmul.f32 %v1266, %v1268
  %v1270 = vadd.f32 %v1266, %v1269
  %vm1271 = vweird.f32 %v1054
  %vm1272 = vweird.f32 %v1266
  %vm1273 = vmor %vm1271, %vm1272
  %v1274 = vsel %vm1273, %v1266, %v1270
  %v1275 = vand.u32 2147483647, %v1054
  %vm1276 = vcmp.eq.f32.partialorder %v1275, 8.507059e+37
  %v1277 = vand.u32 %v1054, 2147483648
  %v1278 = vor.u32 1.1754944e-38, %v1277
  %v1279 = vsel %vm1276, %v1278, %v1274
  %v1280 = vmul.f32 1.0, %v1279
  %v1281 = vrcp.pop %v1055
  %v1282 = vmul.f32 %v1055, %v1281
  %v1283 = vsub.f32 1.0, %v1282
  %v1284 = vmul.f32 %v1281, %v1283
  %v1285 = vadd.f32 %v1281, %v1284
  %vm1286 = vweird.f32 %v1055
  %vm1287 = vweird.f32 %v1281
  %vm1288 = vmor %vm1286, %vm1287
  %v1289 = vsel %vm1288, %v1281, %v1285
  %v1290 = vand.u32 2147483647, %v1055
  %vm1291 = vcmp.eq.f32.partialorder %v1290, 8.507059e+37
  %v1292 = vand.u32 %v1055, 2147483648
  %v1293 = vor.u32 1.1754944e-38, %v1292
  %v1294 = vsel %vm1291, %v1293, %v1289
  %v1295 = vmul.f32 1.0, %v1294
  %vm1296 = vcmp.eq.f32.partialorder %v992, %v1009
  %vm1297 = vcmp.eq.f32.partialorder %v993, %v1011
  %vm1298 = vcmp.eq.f32.partialorder %v994, %v1013
  %vm1299 = vcmp.eq.f32.partialorder %v995, %v1015
  %vm1300 = vcmp.eq.f32.partialorder %v996, %v1017
  %vm1301 = vcmp.eq.f32.partialorder %v997, %v1019
  %vm1302 = vcmp.eq.f32.partialorder %v998, %v1021
  %vm1303 = vcmp.eq.f32.partialorder %v999, %v1023
  %vm1304 = vcmp.eq.f32.partialorder %v1000, %v1025
  %vm1305 = vcmp.eq.f32.partialorder %v1001, %v1027
  %vm1306 = vcmp.eq.f32.partialorder %v1002, %v1029
  %vm1307 = vcmp.eq.f32.partialorder %v1003, %v1031
  %vm1308 = vcmp.eq.f32.partialorder %v1004, %v1033
  %vm1309 = vcmp.eq.f32.partialorder %v1005, %v1035
  %vm1310 = vcmp.eq.f32.partialorder %v1006, %v1037
  %vm1311 = vcmp.eq.f32.partialorder %v1007, %v1039
  %v1312 = vsel %vm1296, %v399, 128
  %v1313 = vsel %vm1297, %v399, 128
  %v1314 = vsel %vm1298, %v399, 128
  %v1315 = vsel %vm1299, %v399, 128
  %v1316 = vsel %vm1300, %v399, 128
  %v1317 = vsel %vm1301, %v399, 128
  %v1318 = vsel %vm1302, %v399, 128
  %v1319 = vsel %vm1303, %v399, 128
  %v1320 = vsel %vm1304, %v399, 128
  %v1321 = vsel %vm1305, %v399, 128
  %v1322 = vsel %vm1306, %v399, 128
  %v1323 = vsel %vm1307, %v399, 128
  %v1324 = vsel %vm1308, %v399, 128
  %v1325 = vsel %vm1309, %v399, 128
  %v1326 = vsel %vm1310, %v399, 128
  %v1327 = vsel %vm1311, %v399, 128
  %v1328 = vand.u32 %v1312, 65535
  %v1329 = vshra.s32 %v1312, 16
  %v1330 = vcvt.s32.f32 %v1328
  %v1331 = vcvt.s32.f32 %v1329
  %1332 = vmin.xlane.f32.xlu0 %v1331
  %v1333 = vpop.xlane.xlu0 %1332
  %vm1334 = vcmp.eq.f32.partialorder %v1331, %v1333
  %v1335 = vsel %vm1334, %v1330, inf
  %1336 = vmin.xlane.f32.xlu0 %v1335
  %v1337 = vpop.xlane.xlu0 %1336
  %v1338 = vcvt.f32.s32 %v1337
  %v1339 = vcvt.f32.s32 %v1333
  %v1340 = vshll.u32 %v1339, 16
  %v1341 = vadd.s32 %v1340, %v1338
  %v1342 = vand.u32 %v1313, 65535
  %v1343 = vshra.s32 %v1313, 16
  %v1344 = vcvt.s32.f32 %v1342
  %v1345 = vcvt.s32.f32 %v1343
  %1346 = vmin.xlane.f32.xlu0 %v1345
  %v1347 = vpop.xlane.xlu0 %1346
  %vm1348 = vcmp.eq.f32.partialorder %v1345, %v1347
  %v1349 = vsel %vm1348, %v1344, inf
  %1350 = vmin.xlane.f32.xlu0 %v1349
  %v1351 = vpop.xlane.xlu0 %1350
  %v1352 = vcvt.f32.s32 %v1351
  %v1353 = vcvt.f32.s32 %v1347
  %v1354 = vshll.u32 %v1353, 16
  %v1355 = vadd.s32 %v1354, %v1352
  %v1356 = vand.u32 %v1314, 65535
  %v1357 = vshra.s32 %v1314, 16
  %v1358 = vcvt.s32.f32 %v1356
  %v1359 = vcvt.s32.f32 %v1357
  %1360 = vmin.xlane.f32.xlu0 %v1359
  %v1361 = vpop.xlane.xlu0 %1360
  %vm1362 = vcmp.eq.f32.partialorder %v1359, %v1361
  %v1363 = vsel %vm1362, %v1358, inf
  %1364 = vmin.xlane.f32.xlu0 %v1363
  %v1365 = vpop.xlane.xlu0 %1364
  %v1366 = vcvt.f32.s32 %v1365
  %v1367 = vcvt.f32.s32 %v1361
  %v1368 = vshll.u32 %v1367, 16
  %v1369 = vadd.s32 %v1368, %v1366
  %v1370 = vand.u32 %v1315, 65535
  %v1371 = vshra.s32 %v1315, 16
  %v1372 = vcvt.s32.f32 %v1370
  %v1373 = vcvt.s32.f32 %v1371
  %1374 = vmin.xlane.f32.xlu0 %v1373
  %v1375 = vpop.xlane.xlu0 %1374
  %vm1376 = vcmp.eq.f32.partialorder %v1373, %v1375
  %v1377 = vsel %vm1376, %v1372, inf
  %1378 = vmin.xlane.f32.xlu0 %v1377
  %v1379 = vpop.xlane.xlu0 %1378
  %v1380 = vcvt.f32.s32 %v1379
  %v1381 = vcvt.f32.s32 %v1375
  %v1382 = vshll.u32 %v1381, 16
  %v1383 = vadd.s32 %v1382, %v1380
  %v1384 = vand.u32 %v1316, 65535
  %v1385 = vshra.s32 %v1316, 16
  %v1386 = vcvt.s32.f32 %v1384
  %v1387 = vcvt.s32.f32 %v1385
  %1388 = vmin.xlane.f32.xlu0 %v1387
  %v1389 = vpop.xlane.xlu0 %1388
  %vm1390 = vcmp.eq.f32.partialorder %v1387, %v1389
  %v1391 = vsel %vm1390, %v1386, inf
  %1392 = vmin.xlane.f32.xlu0 %v1391
  %v1393 = vpop.xlane.xlu0 %1392
  %v1394 = vcvt.f32.s32 %v1393
  %v1395 = vcvt.f32.s32 %v1389
  %v1396 = vshll.u32 %v1395, 16
  %v1397 = vadd.s32 %v1396, %v1394
  %v1398 = vand.u32 %v1317, 65535
  %v1399 = vshra.s32 %v1317, 16
  %v1400 = vcvt.s32.f32 %v1398
  %v1401 = vcvt.s32.f32 %v1399
  %1402 = vmin.xlane.f32.xlu0 %v1401
  %v1403 = vpop.xlane.xlu0 %1402
  %vm1404 = vcmp.eq.f32.partialorder %v1401, %v1403
  %v1405 = vsel %vm1404, %v1400, inf
  %1406 = vmin.xlane.f32.xlu0 %v1405
  %v1407 = vpop.xlane.xlu0 %1406
  %v1408 = vcvt.f32.s32 %v1407
  %v1409 = vcvt.f32.s32 %v1403
  %v1410 = vshll.u32 %v1409, 16
  %v1411 = vadd.s32 %v1410, %v1408
  %v1412 = vand.u32 %v1318, 65535
  %v1413 = vshra.s32 %v1318, 16
  %v1414 = vcvt.s32.f32 %v1412
  %v1415 = vcvt.s32.f32 %v1413
  %1416 = vmin.xlane.f32.xlu0 %v1415
  %v1417 = vpop.xlane.xlu0 %1416
  %vm1418 = vcmp.eq.f32.partialorder %v1415, %v1417
  %v1419 = vsel %vm1418, %v1414, inf
  %1420 = vmin.xlane.f32.xlu0 %v1419
  %v1421 = vpop.xlane.xlu0 %1420
  %v1422 = vcvt.f32.s32 %v1421
  %v1423 = vcvt.f32.s32 %v1417
  %v1424 = vshll.u32 %v1423, 16
  %v1425 = vadd.s32 %v1424, %v1422
  %v1426 = vand.u32 %v1319, 65535
  %v1427 = vshra.s32 %v1319, 16
  %v1428 = vcvt.s32.f32 %v1426
  %v1429 = vcvt.s32.f32 %v1427
  %1430 = vmin.xlane.f32.xlu0 %v1429
  %v1431 = vpop.xlane.xlu0 %1430
  %vm1432 = vcmp.eq.f32.partialorder %v1429, %v1431
  %v1433 = vsel %vm1432, %v1428, inf
  %1434 = vmin.xlane.f32.xlu0 %v1433
  %v1435 = vpop.xlane.xlu0 %1434
  %v1436 = vcvt.f32.s32 %v1435
  %v1437 = vcvt.f32.s32 %v1431
  %v1438 = vshll.u32 %v1437, 16
  %v1439 = vadd.s32 %v1438, %v1436
  %v1440 = vand.u32 %v1320, 65535
  %v1441 = vshra.s32 %v1320, 16
  %v1442 = vcvt.s32.f32 %v1440
  %v1443 = vcvt.s32.f32 %v1441
  %1444 = vmin.xlane.f32.xlu0 %v1443
  %v1445 = vpop.xlane.xlu0 %1444
  %vm1446 = vcmp.eq.f32.partialorder %v1443, %v1445
  %v1447 = vsel %vm1446, %v1442, inf
  %1448 = vmin.xlane.f32.xlu0 %v1447
  %v1449 = vpop.xlane.xlu0 %1448
  %v1450 = vcvt.f32.s32 %v1449
  %v1451 = vcvt.f32.s32 %v1445
  %v1452 = vshll.u32 %v1451, 16
  %v1453 = vadd.s32 %v1452, %v1450
  %v1454 = vand.u32 %v1321, 65535
  %v1455 = vshra.s32 %v1321, 16
  %v1456 = vcvt.s32.f32 %v1454
  %v1457 = vcvt.s32.f32 %v1455
  %1458 = vmin.xlane.f32.xlu0 %v1457
  %v1459 = vpop.xlane.xlu0 %1458
  %vm1460 = vcmp.eq.f32.partialorder %v1457, %v1459
  %v1461 = vsel %vm1460, %v1456, inf
  %1462 = vmin.xlane.f32.xlu0 %v1461
  %v1463 = vpop.xlane.xlu0 %1462
  %v1464 = vcvt.f32.s32 %v1463
  %v1465 = vcvt.f32.s32 %v1459
  %v1466 = vshll.u32 %v1465, 16
  %v1467 = vadd.s32 %v1466, %v1464
  %v1468 = vand.u32 %v1322, 65535
  %v1469 = vshra.s32 %v1322, 16
  %v1470 = vcvt.s32.f32 %v1468
  %v1471 = vcvt.s32.f32 %v1469
  %1472 = vmin.xlane.f32.xlu0 %v1471
  %v1473 = vpop.xlane.xlu0 %1472
  %vm1474 = vcmp.eq.f32.partialorder %v1471, %v1473
  %v1475 = vsel %vm1474, %v1470, inf
  %1476 = vmin.xlane.f32.xlu0 %v1475
  %v1477 = vpop.xlane.xlu0 %1476
  %v1478 = vcvt.f32.s32 %v1477
  %v1479 = vcvt.f32.s32 %v1473
  %v1480 = vshll.u32 %v1479, 16
  %v1481 = vadd.s32 %v1480, %v1478
  %v1482 = vand.u32 %v1323, 65535
  %v1483 = vshra.s32 %v1323, 16
  %v1484 = vcvt.s32.f32 %v1482
  %v1485 = vcvt.s32.f32 %v1483
  %1486 = vmin.xlane.f32.xlu0 %v1485
  %v1487 = vpop.xlane.xlu0 %1486
  %vm1488 = vcmp.eq.f32.partialorder %v1485, %v1487
  %v1489 = vsel %vm1488, %v1484, inf
  %1490 = vmin.xlane.f32.xlu0 %v1489
  %v1491 = vpop.xlane.xlu0 %1490
  %v1492 = vcvt.f32.s32 %v1491
  %v1493 = vcvt.f32.s32 %v1487
  %v1494 = vshll.u32 %v1493, 16
  %v1495 = vadd.s32 %v1494, %v1492
  %v1496 = vand.u32 %v1324, 65535
  %v1497 = vshra.s32 %v1324, 16
  %v1498 = vcvt.s32.f32 %v1496
  %v1499 = vcvt.s32.f32 %v1497
  %1500 = vmin.xlane.f32.xlu0 %v1499
  %v1501 = vpop.xlane.xlu0 %1500
  %vm1502 = vcmp.eq.f32.partialorder %v1499, %v1501
  %v1503 = vsel %vm1502, %v1498, inf
  %1504 = vmin.xlane.f32.xlu0 %v1503
  %v1505 = vpop.xlane.xlu0 %1504
  %v1506 = vcvt.f32.s32 %v1505
  %v1507 = vcvt.f32.s32 %v1501
  %v1508 = vshll.u32 %v1507, 16
  %v1509 = vadd.s32 %v1508, %v1506
  %v1510 = vand.u32 %v1325, 65535
  %v1511 = vshra.s32 %v1325, 16
  %v1512 = vcvt.s32.f32 %v1510
  %v1513 = vcvt.s32.f32 %v1511
  %1514 = vmin.xlane.f32.xlu0 %v1513
  %v1515 = vpop.xlane.xlu0 %1514
  %vm1516 = vcmp.eq.f32.partialorder %v1513, %v1515
  %v1517 = vsel %vm1516, %v1512, inf
  %1518 = vmin.xlane.f32.xlu0 %v1517
  %v1519 = vpop.xlane.xlu0 %1518
  %v1520 = vcvt.f32.s32 %v1519
  %v1521 = vcvt.f32.s32 %v1515
  %v1522 = vshll.u32 %v1521, 16
  %v1523 = vadd.s32 %v1522, %v1520
  %v1524 = vand.u32 %v1326, 65535
  %v1525 = vshra.s32 %v1326, 16
  %v1526 = vcvt.s32.f32 %v1524
  %v1527 = vcvt.s32.f32 %v1525
  %1528 = vmin.xlane.f32.xlu0 %v1527
  %v1529 = vpop.xlane.xlu0 %1528
  %vm1530 = vcmp.eq.f32.partialorder %v1527, %v1529
  %v1531 = vsel %vm1530, %v1526, inf
  %1532 = vmin.xlane.f32.xlu0 %v1531
  %v1533 = vpop.xlane.xlu0 %1532
  %v1534 = vcvt.f32.s32 %v1533
  %v1535 = vcvt.f32.s32 %v1529
  %v1536 = vshll.u32 %v1535, 16
  %v1537 = vadd.s32 %v1536, %v1534
  %v1538 = vand.u32 %v1327, 65535
  %v1539 = vshra.s32 %v1327, 16
  %v1540 = vcvt.s32.f32 %v1538
  %v1541 = vcvt.s32.f32 %v1539
  %1542 = vmin.xlane.f32.xlu0 %v1541
  %v1543 = vpop.xlane.xlu0 %1542
  %vm1544 = vcmp.eq.f32.partialorder %v1541, %v1543
  %v1545 = vsel %vm1544, %v1540, inf
  %1546 = vmin.xlane.f32.xlu0 %v1545
  %v1547 = vpop.xlane.xlu0 %1546
  %v1548 = vcvt.f32.s32 %v1547
  %v1549 = vcvt.f32.s32 %v1543
  %v1550 = vshll.u32 %v1549, 16
  %v1551 = vadd.s32 %v1550, %v1548
  %vm1552 = vcmp.eq.s32.totalorder %v399, %v1341
  %vm1553 = vcmp.eq.s32.totalorder %v399, %v1355
  %vm1554 = vcmp.eq.s32.totalorder %v399, %v1369
  %vm1555 = vcmp.eq.s32.totalorder %v399, %v1383
  %vm1556 = vcmp.eq.s32.totalorder %v399, %v1397
  %vm1557 = vcmp.eq.s32.totalorder %v399, %v1411
  %vm1558 = vcmp.eq.s32.totalorder %v399, %v1425
  %vm1559 = vcmp.eq.s32.totalorder %v399, %v1439
  %vm1560 = vcmp.eq.s32.totalorder %v399, %v1453
  %vm1561 = vcmp.eq.s32.totalorder %v399, %v1467
  %vm1562 = vcmp.eq.s32.totalorder %v399, %v1481
  %vm1563 = vcmp.eq.s32.totalorder %v399, %v1495
  %vm1564 = vcmp.eq.s32.totalorder %v399, %v1509
  %vm1565 = vcmp.eq.s32.totalorder %v399, %v1523
  %vm1566 = vcmp.eq.s32.totalorder %v399, %v1537
  %vm1567 = vcmp.eq.s32.totalorder %v399, %v1551
  %v1568 = vsel %vm1552, %v1070, %v960
  %v1569 = vsel %vm1553, %v1085, %v961
  %v1570 = vsel %vm1554, %v1100, %v962
  %v1571 = vsel %vm1555, %v1115, %v963
  %v1572 = vsel %vm1556, %v1130, %v964
  %v1573 = vsel %vm1557, %v1145, %v965
  %v1574 = vsel %vm1558, %v1160, %v966
  %v1575 = vsel %vm1559, %v1175, %v967
  %v1576 = vsel %vm1560, %v1190, %v968
  %v1577 = vsel %vm1561, %v1205, %v969
  %v1578 = vsel %vm1562, %v1220, %v970
  %v1579 = vsel %vm1563, %v1235, %v971
  %v1580 = vsel %vm1564, %v1250, %v972
  %v1581 = vsel %vm1565, %v1265, %v973
  %v1582 = vsel %vm1566, %v1280, %v974
  %v1583 = vsel %vm1567, %v1295, %v975
  %v1584 = vadd.f32 %v976, %v1070
  %v1585 = vadd.f32 %v977, %v1085
  %v1586 = vadd.f32 %v978, %v1100
  %v1587 = vadd.f32 %v979, %v1115
  %v1588 = vadd.f32 %v980, %v1130
  %v1589 = vadd.f32 %v981, %v1145
  %v1590 = vadd.f32 %v982, %v1160
  %v1591 = vadd.f32 %v983, %v1175
  %v1592 = vadd.f32 %v984, %v1190
  %v1593 = vadd.f32 %v985, %v1205
  %v1594 = vadd.f32 %v986, %v1220
  %v1595 = vadd.f32 %v987, %v1235
  %v1596 = vadd.f32 %v988, %v1250
  %v1597 = vadd.f32 %v989, %v1265
  %v1598 = vadd.f32 %v990, %v1280
  %v1599 = vadd.f32 %v991, %v1295
  %v1600 = vsel %vm1552, inf, %v992
  %v1601 = vsel %vm1553, inf, %v993
  %v1602 = vsel %vm1554, inf, %v994
  %v1603 = vsel %vm1555, inf, %v995
  %v1604 = vsel %vm1556, inf, %v996
  %v1605 = vsel %vm1557, inf, %v997
  %v1606 = vsel %vm1558, inf, %v998
  %v1607 = vsel %vm1559, inf, %v999
  %v1608 = vsel %vm1560, inf, %v1000
  %v1609 = vsel %vm1561, inf, %v1001
  %v1610 = vsel %vm1562, inf, %v1002
  %v1611 = vsel %vm1563, inf, %v1003
  %v1612 = vsel %vm1564, inf, %v1004
  %v1613 = vsel %vm1565, inf, %v1005
  %v1614 = vsel %vm1566, inf, %v1006
  %v1615 = vsel %vm1567, inf, %v1007
  %1616 = vmin.xlane.f32.xlu0 %v1600
  %v1617 = vpop.xlane.xlu0 %1616
  %1618 = vmin.xlane.f32.xlu0 %v1601
  %v1619 = vpop.xlane.xlu0 %1618
  %1620 = vmin.xlane.f32.xlu0 %v1602
  %v1621 = vpop.xlane.xlu0 %1620
  %1622 = vmin.xlane.f32.xlu0 %v1603
  %v1623 = vpop.xlane.xlu0 %1622
  %1624 = vmin.xlane.f32.xlu0 %v1604
  %v1625 = vpop.xlane.xlu0 %1624
  %1626 = vmin.xlane.f32.xlu0 %v1605
  %v1627 = vpop.xlane.xlu0 %1626
  %1628 = vmin.xlane.f32.xlu0 %v1606
  %v1629 = vpop.xlane.xlu0 %1628
  %1630 = vmin.xlane.f32.xlu0 %v1607
  %v1631 = vpop.xlane.xlu0 %1630
  %1632 = vmin.xlane.f32.xlu0 %v1608
  %v1633 = vpop.xlane.xlu0 %1632
  %1634 = vmin.xlane.f32.xlu0 %v1609
  %v1635 = vpop.xlane.xlu0 %1634
  %1636 = vmin.xlane.f32.xlu0 %v1610
  %v1637 = vpop.xlane.xlu0 %1636
  %1638 = vmin.xlane.f32.xlu0 %v1611
  %v1639 = vpop.xlane.xlu0 %1638
  %1640 = vmin.xlane.f32.xlu0 %v1612
  %v1641 = vpop.xlane.xlu0 %1640
  %1642 = vmin.xlane.f32.xlu0 %v1613
  %v1643 = vpop.xlane.xlu0 %1642
  %1644 = vmin.xlane.f32.xlu0 %v1614
  %v1645 = vpop.xlane.xlu0 %1644
  %1646 = vmin.xlane.f32.xlu0 %v1615
  %v1647 = vpop.xlane.xlu0 %1646
  %v1648 = vmax.f32 %v1617, 1e-16
  %v1649 = vmax.f32 %v1619, 1e-16
  %v1650 = vmax.f32 %v1621, 1e-16
  %v1651 = vmax.f32 %v1623, 1e-16
  %v1652 = vmax.f32 %v1625, 1e-16
  %v1653 = vmax.f32 %v1627, 1e-16
  %v1654 = vmax.f32 %v1629, 1e-16
  %v1655 = vmax.f32 %v1631, 1e-16
  %v1656 = vmax.f32 %v1633, 1e-16
  %v1657 = vmax.f32 %v1635, 1e-16
  %v1658 = vmax.f32 %v1637, 1e-16
  %v1659 = vmax.f32 %v1639, 1e-16
  %v1660 = vmax.f32 %v1641, 1e-16
  %v1661 = vmax.f32 %v1643, 1e-16
  %v1662 = vmax.f32 %v1645, 1e-16
  %v1663 = vmax.f32 %v1647, 1e-16
  %v1664 = vrcp.pop %v1648
  %v1665 = vmul.f32 %v1648, %v1664
  %v1666 = vsub.f32 1.0, %v1665
  %v1667 = vmul.f32 %v1664, %v1666
  %v1668 = vadd.f32 %v1664, %v1667
  %vm1669 = vweird.f32 %v1648
  %vm1670 = vweird.f32 %v1664
  %vm1671 = vmor %vm1669, %vm1670
  %v1672 = vsel %vm1671, %v1664, %v1668
  %v1673 = vand.u32 2147483647, %v1648
  %vm1674 = vcmp.eq.f32.partialorder %v1673, 8.507059e+37
  %v1675 = vand.u32 %v1648, 2147483648
  %v1676 = vor.u32 1.1754944e-38, %v1675
  %v1677 = vsel %vm1674, %v1676, %v1672
  %v1678 = vmul.f32 1.0, %v1677
  %v1679 = vrcp.pop %v1649
  %v1680 = vmul.f32 %v1649, %v1679
  %v1681 = vsub.f32 1.0, %v1680
  %v1682 = vmul.f32 %v1679, %v1681
  %v1683 = vadd.f32 %v1679, %v1682
  %vm1684 = vweird.f32 %v1649
  %vm1685 = vweird.f32 %v1679
  %vm1686 = vmor %vm1684, %vm1685
  %v1687 = vsel %vm1686, %v1679, %v1683
  %v1688 = vand.u32 2147483647, %v1649
  %vm1689 = vcmp.eq.f32.partialorder %v1688, 8.507059e+37
  %v1690 = vand.u32 %v1649, 2147483648
  %v1691 = vor.u32 1.1754944e-38, %v1690
  %v1692 = vsel %vm1689, %v1691, %v1687
  %v1693 = vmul.f32 1.0, %v1692
  %v1694 = vrcp.pop %v1650
  %v1695 = vmul.f32 %v1650, %v1694
  %v1696 = vsub.f32 1.0, %v1695
  %v1697 = vmul.f32 %v1694, %v1696
  %v1698 = vadd.f32 %v1694, %v1697
  %vm1699 = vweird.f32 %v1650
  %vm1700 = vweird.f32 %v1694
  %vm1701 = vmor %vm1699, %vm1700
  %v1702 = vsel %vm1701, %v1694, %v1698
  %v1703 = vand.u32 2147483647, %v1650
  %vm1704 = vcmp.eq.f32.partialorder %v1703, 8.507059e+37
  %v1705 = vand.u32 %v1650, 2147483648
  %v1706 = vor.u32 1.1754944e-38, %v1705
  %v1707 = vsel %vm1704, %v1706, %v1702
  %v1708 = vmul.f32 1.0, %v1707
  %v1709 = vrcp.pop %v1651
  %v1710 = vmul.f32 %v1651, %v1709
  %v1711 = vsub.f32 1.0, %v1710
  %v1712 = vmul.f32 %v1709, %v1711
  %v1713 = vadd.f32 %v1709, %v1712
  %vm1714 = vweird.f32 %v1651
  %vm1715 = vweird.f32 %v1709
  %vm1716 = vmor %vm1714, %vm1715
  %v1717 = vsel %vm1716, %v1709, %v1713
  %v1718 = vand.u32 2147483647, %v1651
  %vm1719 = vcmp.eq.f32.partialorder %v1718, 8.507059e+37
  %v1720 = vand.u32 %v1651, 2147483648
  %v1721 = vor.u32 1.1754944e-38, %v1720
  %v1722 = vsel %vm1719, %v1721, %v1717
  %v1723 = vmul.f32 1.0, %v1722
  %v1724 = vrcp.pop %v1652
  %v1725 = vmul.f32 %v1652, %v1724
  %v1726 = vsub.f32 1.0, %v1725
  %v1727 = vmul.f32 %v1724, %v1726
  %v1728 = vadd.f32 %v1724, %v1727
  %vm1729 = vweird.f32 %v1652
  %vm1730 = vweird.f32 %v1724
  %vm1731 = vmor %vm1729, %vm1730
  %v1732 = vsel %vm1731, %v1724, %v1728
  %v1733 = vand.u32 2147483647, %v1652
  %vm1734 = vcmp.eq.f32.partialorder %v1733, 8.507059e+37
  %v1735 = vand.u32 %v1652, 2147483648
  %v1736 = vor.u32 1.1754944e-38, %v1735
  %v1737 = vsel %vm1734, %v1736, %v1732
  %v1738 = vmul.f32 1.0, %v1737
  %v1739 = vrcp.pop %v1653
  %v1740 = vmul.f32 %v1653, %v1739
  %v1741 = vsub.f32 1.0, %v1740
  %v1742 = vmul.f32 %v1739, %v1741
  %v1743 = vadd.f32 %v1739, %v1742
  %vm1744 = vweird.f32 %v1653
  %vm1745 = vweird.f32 %v1739
  %vm1746 = vmor %vm1744, %vm1745
  %v1747 = vsel %vm1746, %v1739, %v1743
  %v1748 = vand.u32 2147483647, %v1653
  %vm1749 = vcmp.eq.f32.partialorder %v1748, 8.507059e+37
  %v1750 = vand.u32 %v1653, 2147483648
  %v1751 = vor.u32 1.1754944e-38, %v1750
  %v1752 = vsel %vm1749, %v1751, %v1747
  %v1753 = vmul.f32 1.0, %v1752
  %v1754 = vrcp.pop %v1654
  %v1755 = vmul.f32 %v1654, %v1754
  %v1756 = vsub.f32 1.0, %v1755
  %v1757 = vmul.f32 %v1754, %v1756
  %v1758 = vadd.f32 %v1754, %v1757
  %vm1759 = vweird.f32 %v1654
  %vm1760 = vweird.f32 %v1754
  %vm1761 = vmor %vm1759, %vm1760
  %v1762 = vsel %vm1761, %v1754, %v1758
  %v1763 = vand.u32 2147483647, %v1654
  %vm1764 = vcmp.eq.f32.partialorder %v1763, 8.507059e+37
  %v1765 = vand.u32 %v1654, 2147483648
  %v1766 = vor.u32 1.1754944e-38, %v1765
  %v1767 = vsel %vm1764, %v1766, %v1762
  %v1768 = vmul.f32 1.0, %v1767
  %v1769 = vrcp.pop %v1655
  %v1770 = vmul.f32 %v1655, %v1769
  %v1771 = vsub.f32 1.0, %v1770
  %v1772 = vmul.f32 %v1769, %v1771
  %v1773 = vadd.f32 %v1769, %v1772
  %vm1774 = vweird.f32 %v1655
  %vm1775 = vweird.f32 %v1769
  %vm1776 = vmor %vm1774, %vm1775
  %v1777 = vsel %vm1776, %v1769, %v1773
  %v1778 = vand.u32 2147483647, %v1655
  %vm1779 = vcmp.eq.f32.partialorder %v1778, 8.507059e+37
  %v1780 = vand.u32 %v1655, 2147483648
  %v1781 = vor.u32 1.1754944e-38, %v1780
  %v1782 = vsel %vm1779, %v1781, %v1777
  %v1783 = vmul.f32 1.0, %v1782
  %v1784 = vrcp.pop %v1656
  %v1785 = vmul.f32 %v1656, %v1784
  %v1786 = vsub.f32 1.0, %v1785
  %v1787 = vmul.f32 %v1784, %v1786
  %v1788 = vadd.f32 %v1784, %v1787
  %vm1789 = vweird.f32 %v1656
  %vm1790 = vweird.f32 %v1784
  %vm1791 = vmor %vm1789, %vm1790
  %v1792 = vsel %vm1791, %v1784, %v1788
  %v1793 = vand.u32 2147483647, %v1656
  %vm1794 = vcmp.eq.f32.partialorder %v1793, 8.507059e+37
  %v1795 = vand.u32 %v1656, 2147483648
  %v1796 = vor.u32 1.1754944e-38, %v1795
  %v1797 = vsel %vm1794, %v1796, %v1792
  %v1798 = vmul.f32 1.0, %v1797
  %v1799 = vrcp.pop %v1657
  %v1800 = vmul.f32 %v1657, %v1799
  %v1801 = vsub.f32 1.0, %v1800
  %v1802 = vmul.f32 %v1799, %v1801
  %v1803 = vadd.f32 %v1799, %v1802
  %vm1804 = vweird.f32 %v1657
  %vm1805 = vweird.f32 %v1799
  %vm1806 = vmor %vm1804, %vm1805
  %v1807 = vsel %vm1806, %v1799, %v1803
  %v1808 = vand.u32 2147483647, %v1657
  %vm1809 = vcmp.eq.f32.partialorder %v1808, 8.507059e+37
  %v1810 = vand.u32 %v1657, 2147483648
  %v1811 = vor.u32 1.1754944e-38, %v1810
  %v1812 = vsel %vm1809, %v1811, %v1807
  %v1813 = vmul.f32 1.0, %v1812
  %v1814 = vrcp.pop %v1658
  %v1815 = vmul.f32 %v1658, %v1814
  %v1816 = vsub.f32 1.0, %v1815
  %v1817 = vmul.f32 %v1814, %v1816
  %v1818 = vadd.f32 %v1814, %v1817
  %vm1819 = vweird.f32 %v1658
  %vm1820 = vweird.f32 %v1814
  %vm1821 = vmor %vm1819, %vm1820
  %v1822 = vsel %vm1821, %v1814, %v1818
  %v1823 = vand.u32 2147483647, %v1658
  %vm1824 = vcmp.eq.f32.partialorder %v1823, 8.507059e+37
  %v1825 = vand.u32 %v1658, 2147483648
  %v1826 = vor.u32 1.1754944e-38, %v1825
  %v1827 = vsel %vm1824, %v1826, %v1822
  %v1828 = vmul.f32 1.0, %v1827
  %v1829 = vrcp.pop %v1659
  %v1830 = vmul.f32 %v1659, %v1829
  %v1831 = vsub.f32 1.0, %v1830
  %v1832 = vmul.f32 %v1829, %v1831
  %v1833 = vadd.f32 %v1829, %v1832
  %vm1834 = vweird.f32 %v1659
  %vm1835 = vweird.f32 %v1829
  %vm1836 = vmor %vm1834, %vm1835
  %v1837 = vsel %vm1836, %v1829, %v1833
  %v1838 = vand.u32 2147483647, %v1659
  %vm1839 = vcmp.eq.f32.partialorder %v1838, 8.507059e+37
  %v1840 = vand.u32 %v1659, 2147483648
  %v1841 = vor.u32 1.1754944e-38, %v1840
  %v1842 = vsel %vm1839, %v1841, %v1837
  %v1843 = vmul.f32 1.0, %v1842
  %v1844 = vrcp.pop %v1660
  %v1845 = vmul.f32 %v1660, %v1844
  %v1846 = vsub.f32 1.0, %v1845
  %v1847 = vmul.f32 %v1844, %v1846
  %v1848 = vadd.f32 %v1844, %v1847
  %vm1849 = vweird.f32 %v1660
  %vm1850 = vweird.f32 %v1844
  %vm1851 = vmor %vm1849, %vm1850
  %v1852 = vsel %vm1851, %v1844, %v1848
  %v1853 = vand.u32 2147483647, %v1660
  %vm1854 = vcmp.eq.f32.partialorder %v1853, 8.507059e+37
  %v1855 = vand.u32 %v1660, 2147483648
  %v1856 = vor.u32 1.1754944e-38, %v1855
  %v1857 = vsel %vm1854, %v1856, %v1852
  %v1858 = vmul.f32 1.0, %v1857
  %v1859 = vrcp.pop %v1661
  %v1860 = vmul.f32 %v1661, %v1859
  %v1861 = vsub.f32 1.0, %v1860
  %v1862 = vmul.f32 %v1859, %v1861
  %v1863 = vadd.f32 %v1859, %v1862
  %vm1864 = vweird.f32 %v1661
  %vm1865 = vweird.f32 %v1859
  %vm1866 = vmor %vm1864, %vm1865
  %v1867 = vsel %vm1866, %v1859, %v1863
  %v1868 = vand.u32 2147483647, %v1661
  %vm1869 = vcmp.eq.f32.partialorder %v1868, 8.507059e+37
  %v1870 = vand.u32 %v1661, 2147483648
  %v1871 = vor.u32 1.1754944e-38, %v1870
  %v1872 = vsel %vm1869, %v1871, %v1867
  %v1873 = vmul.f32 1.0, %v1872
  %v1874 = vrcp.pop %v1662
  %v1875 = vmul.f32 %v1662, %v1874
  %v1876 = vsub.f32 1.0, %v1875
  %v1877 = vmul.f32 %v1874, %v1876
  %v1878 = vadd.f32 %v1874, %v1877
  %vm1879 = vweird.f32 %v1662
  %vm1880 = vweird.f32 %v1874
  %vm1881 = vmor %vm1879, %vm1880
  %v1882 = vsel %vm1881, %v1874, %v1878
  %v1883 = vand.u32 2147483647, %v1662
  %vm1884 = vcmp.eq.f32.partialorder %v1883, 8.507059e+37
  %v1885 = vand.u32 %v1662, 2147483648
  %v1886 = vor.u32 1.1754944e-38, %v1885
  %v1887 = vsel %vm1884, %v1886, %v1882
  %v1888 = vmul.f32 1.0, %v1887
  %v1889 = vrcp.pop %v1663
  %v1890 = vmul.f32 %v1663, %v1889
  %v1891 = vsub.f32 1.0, %v1890
  %v1892 = vmul.f32 %v1889, %v1891
  %v1893 = vadd.f32 %v1889, %v1892
  %vm1894 = vweird.f32 %v1663
  %vm1895 = vweird.f32 %v1889
  %vm1896 = vmor %vm1894, %vm1895
  %v1897 = vsel %vm1896, %v1889, %v1893
  %v1898 = vand.u32 2147483647, %v1663
  %vm1899 = vcmp.eq.f32.partialorder %v1898, 8.507059e+37
  %v1900 = vand.u32 %v1663, 2147483648
  %v1901 = vor.u32 1.1754944e-38, %v1900
  %v1902 = vsel %vm1899, %v1901, %v1897
  %v1903 = vmul.f32 1.0, %v1902
  %vm1904 = vcmp.eq.f32.partialorder %v1600, %v1617
  %vm1905 = vcmp.eq.f32.partialorder %v1601, %v1619
  %vm1906 = vcmp.eq.f32.partialorder %v1602, %v1621
  %vm1907 = vcmp.eq.f32.partialorder %v1603, %v1623
  %vm1908 = vcmp.eq.f32.partialorder %v1604, %v1625
  %vm1909 = vcmp.eq.f32.partialorder %v1605, %v1627
  %vm1910 = vcmp.eq.f32.partialorder %v1606, %v1629
  %vm1911 = vcmp.eq.f32.partialorder %v1607, %v1631
  %vm1912 = vcmp.eq.f32.partialorder %v1608, %v1633
  %vm1913 = vcmp.eq.f32.partialorder %v1609, %v1635
  %vm1914 = vcmp.eq.f32.partialorder %v1610, %v1637
  %vm1915 = vcmp.eq.f32.partialorder %v1611, %v1639
  %vm1916 = vcmp.eq.f32.partialorder %v1612, %v1641
  %vm1917 = vcmp.eq.f32.partialorder %v1613, %v1643
  %vm1918 = vcmp.eq.f32.partialorder %v1614, %v1645
  %vm1919 = vcmp.eq.f32.partialorder %v1615, %v1647
  %v1920 = vsel %vm1904, %v399, 128
  %v1921 = vsel %vm1905, %v399, 128
  %v1922 = vsel %vm1906, %v399, 128
  %v1923 = vsel %vm1907, %v399, 128
  %v1924 = vsel %vm1908, %v399, 128
  %v1925 = vsel %vm1909, %v399, 128
  %v1926 = vsel %vm1910, %v399, 128
  %v1927 = vsel %vm1911, %v399, 128
  %v1928 = vsel %vm1912, %v399, 128
  %v1929 = vsel %vm1913, %v399, 128
  %v1930 = vsel %vm1914, %v399, 128
  %v1931 = vsel %vm1915, %v399, 128
  %v1932 = vsel %vm1916, %v399, 128
  %v1933 = vsel %vm1917, %v399, 128
  %v1934 = vsel %vm1918, %v399, 128
  %v1935 = vsel %vm1919, %v399, 128
  %v1936 = vand.u32 %v1920, 65535
  %v1937 = vshra.s32 %v1920, 16
  %v1938 = vcvt.s32.f32 %v1936
  %v1939 = vcvt.s32.f32 %v1937
  %1940 = vmin.xlane.f32.xlu0 %v1939
  %v1941 = vpop.xlane.xlu0 %1940
  %vm1942 = vcmp.eq.f32.partialorder %v1939, %v1941
  %v1943 = vsel %vm1942, %v1938, inf
  %1944 = vmin.xlane.f32.xlu0 %v1943
  %v1945 = vpop.xlane.xlu0 %1944
  %v1946 = vcvt.f32.s32 %v1945
  %v1947 = vcvt.f32.s32 %v1941
  %v1948 = vshll.u32 %v1947, 16
  %v1949 = vadd.s32 %v1948, %v1946
  %v1950 = vand.u32 %v1921, 65535
  %v1951 = vshra.s32 %v1921, 16
  %v1952 = vcvt.s32.f32 %v1950
  %v1953 = vcvt.s32.f32 %v1951
  %1954 = vmin.xlane.f32.xlu0 %v1953
  %v1955 = vpop.xlane.xlu0 %1954
  %vm1956 = vcmp.eq.f32.partialorder %v1953, %v1955
  %v1957 = vsel %vm1956, %v1952, inf
  %1958 = vmin.xlane.f32.xlu0 %v1957
  %v1959 = vpop.xlane.xlu0 %1958
  %v1960 = vcvt.f32.s32 %v1959
  %v1961 = vcvt.f32.s32 %v1955
  %v1962 = vshll.u32 %v1961, 16
  %v1963 = vadd.s32 %v1962, %v1960
  %v1964 = vand.u32 %v1922, 65535
  %v1965 = vshra.s32 %v1922, 16
  %v1966 = vcvt.s32.f32 %v1964
  %v1967 = vcvt.s32.f32 %v1965
  %1968 = vmin.xlane.f32.xlu0 %v1967
  %v1969 = vpop.xlane.xlu0 %1968
  %vm1970 = vcmp.eq.f32.partialorder %v1967, %v1969
  %v1971 = vsel %vm1970, %v1966, inf
  %1972 = vmin.xlane.f32.xlu0 %v1971
  %v1973 = vpop.xlane.xlu0 %1972
  %v1974 = vcvt.f32.s32 %v1973
  %v1975 = vcvt.f32.s32 %v1969
  %v1976 = vshll.u32 %v1975, 16
  %v1977 = vadd.s32 %v1976, %v1974
  %v1978 = vand.u32 %v1923, 65535
  %v1979 = vshra.s32 %v1923, 16
  %v1980 = vcvt.s32.f32 %v1978
  %v1981 = vcvt.s32.f32 %v1979
  %1982 = vmin.xlane.f32.xlu0 %v1981
  %v1983 = vpop.xlane.xlu0 %1982
  %vm1984 = vcmp.eq.f32.partialorder %v1981, %v1983
  %v1985 = vsel %vm1984, %v1980, inf
  %1986 = vmin.xlane.f32.xlu0 %v1985
  %v1987 = vpop.xlane.xlu0 %1986
  %v1988 = vcvt.f32.s32 %v1987
  %v1989 = vcvt.f32.s32 %v1983
  %v1990 = vshll.u32 %v1989, 16
  %v1991 = vadd.s32 %v1990, %v1988
  %v1992 = vand.u32 %v1924, 65535
  %v1993 = vshra.s32 %v1924, 16
  %v1994 = vcvt.s32.f32 %v1992
  %v1995 = vcvt.s32.f32 %v1993
  %1996 = vmin.xlane.f32.xlu0 %v1995
  %v1997 = vpop.xlane.xlu0 %1996
  %vm1998 = vcmp.eq.f32.partialorder %v1995, %v1997
  %v1999 = vsel %vm1998, %v1994, inf
  %2000 = vmin.xlane.f32.xlu0 %v1999
  %v2001 = vpop.xlane.xlu0 %2000
  %v2002 = vcvt.f32.s32 %v2001
  %v2003 = vcvt.f32.s32 %v1997
  %v2004 = vshll.u32 %v2003, 16
  %v2005 = vadd.s32 %v2004, %v2002
  %v2006 = vand.u32 %v1925, 65535
  %v2007 = vshra.s32 %v1925, 16
  %v2008 = vcvt.s32.f32 %v2006
  %v2009 = vcvt.s32.f32 %v2007
  %2010 = vmin.xlane.f32.xlu0 %v2009
  %v2011 = vpop.xlane.xlu0 %2010
  %vm2012 = vcmp.eq.f32.partialorder %v2009, %v2011
  %v2013 = vsel %vm2012, %v2008, inf
  %2014 = vmin.xlane.f32.xlu0 %v2013
  %v2015 = vpop.xlane.xlu0 %2014
  %v2016 = vcvt.f32.s32 %v2015
  %v2017 = vcvt.f32.s32 %v2011
  %v2018 = vshll.u32 %v2017, 16
  %v2019 = vadd.s32 %v2018, %v2016
  %v2020 = vand.u32 %v1926, 65535
  %v2021 = vshra.s32 %v1926, 16
  %v2022 = vcvt.s32.f32 %v2020
  %v2023 = vcvt.s32.f32 %v2021
  %2024 = vmin.xlane.f32.xlu0 %v2023
  %v2025 = vpop.xlane.xlu0 %2024
  %vm2026 = vcmp.eq.f32.partialorder %v2023, %v2025
  %v2027 = vsel %vm2026, %v2022, inf
  %2028 = vmin.xlane.f32.xlu0 %v2027
  %v2029 = vpop.xlane.xlu0 %2028
  %v2030 = vcvt.f32.s32 %v2029
  %v2031 = vcvt.f32.s32 %v2025
  %v2032 = vshll.u32 %v2031, 16
  %v2033 = vadd.s32 %v2032, %v2030
  %v2034 = vand.u32 %v1927, 65535
  %v2035 = vshra.s32 %v1927, 16
  %v2036 = vcvt.s32.f32 %v2034
  %v2037 = vcvt.s32.f32 %v2035
  %2038 = vmin.xlane.f32.xlu0 %v2037
  %v2039 = vpop.xlane.xlu0 %2038
  %vm2040 = vcmp.eq.f32.partialorder %v2037, %v2039
  %v2041 = vsel %vm2040, %v2036, inf
  %2042 = vmin.xlane.f32.xlu0 %v2041
  %v2043 = vpop.xlane.xlu0 %2042
  %v2044 = vcvt.f32.s32 %v2043
  %v2045 = vcvt.f32.s32 %v2039
  %v2046 = vshll.u32 %v2045, 16
  %v2047 = vadd.s32 %v2046, %v2044
  %v2048 = vand.u32 %v1928, 65535
  %v2049 = vshra.s32 %v1928, 16
  %v2050 = vcvt.s32.f32 %v2048
  %v2051 = vcvt.s32.f32 %v2049
  %2052 = vmin.xlane.f32.xlu0 %v2051
  %v2053 = vpop.xlane.xlu0 %2052
  %vm2054 = vcmp.eq.f32.partialorder %v2051, %v2053
  %v2055 = vsel %vm2054, %v2050, inf
  %2056 = vmin.xlane.f32.xlu0 %v2055
  %v2057 = vpop.xlane.xlu0 %2056
  %v2058 = vcvt.f32.s32 %v2057
  %v2059 = vcvt.f32.s32 %v2053
  %v2060 = vshll.u32 %v2059, 16
  %v2061 = vadd.s32 %v2060, %v2058
  %v2062 = vand.u32 %v1929, 65535
  %v2063 = vshra.s32 %v1929, 16
  %v2064 = vcvt.s32.f32 %v2062
  %v2065 = vcvt.s32.f32 %v2063
  %2066 = vmin.xlane.f32.xlu0 %v2065
  %v2067 = vpop.xlane.xlu0 %2066
  %vm2068 = vcmp.eq.f32.partialorder %v2065, %v2067
  %v2069 = vsel %vm2068, %v2064, inf
  %2070 = vmin.xlane.f32.xlu0 %v2069
  %v2071 = vpop.xlane.xlu0 %2070
  %v2072 = vcvt.f32.s32 %v2071
  %v2073 = vcvt.f32.s32 %v2067
  %v2074 = vshll.u32 %v2073, 16
  %v2075 = vadd.s32 %v2074, %v2072
  %v2076 = vand.u32 %v1930, 65535
  %v2077 = vshra.s32 %v1930, 16
  %v2078 = vcvt.s32.f32 %v2076
  %v2079 = vcvt.s32.f32 %v2077
  %2080 = vmin.xlane.f32.xlu0 %v2079
  %v2081 = vpop.xlane.xlu0 %2080
  %vm2082 = vcmp.eq.f32.partialorder %v2079, %v2081
  %v2083 = vsel %vm2082, %v2078, inf
  %2084 = vmin.xlane.f32.xlu0 %v2083
  %v2085 = vpop.xlane.xlu0 %2084
  %v2086 = vcvt.f32.s32 %v2085
  %v2087 = vcvt.f32.s32 %v2081
  %v2088 = vshll.u32 %v2087, 16
  %v2089 = vadd.s32 %v2088, %v2086
  %v2090 = vand.u32 %v1931, 65535
  %v2091 = vshra.s32 %v1931, 16
  %v2092 = vcvt.s32.f32 %v2090
  %v2093 = vcvt.s32.f32 %v2091
  %2094 = vmin.xlane.f32.xlu0 %v2093
  %v2095 = vpop.xlane.xlu0 %2094
  %vm2096 = vcmp.eq.f32.partialorder %v2093, %v2095
  %v2097 = vsel %vm2096, %v2092, inf
  %2098 = vmin.xlane.f32.xlu0 %v2097
  %v2099 = vpop.xlane.xlu0 %2098
  %v2100 = vcvt.f32.s32 %v2099
  %v2101 = vcvt.f32.s32 %v2095
  %v2102 = vshll.u32 %v2101, 16
  %v2103 = vadd.s32 %v2102, %v2100
  %v2104 = vand.u32 %v1932, 65535
  %v2105 = vshra.s32 %v1932, 16
  %v2106 = vcvt.s32.f32 %v2104
  %v2107 = vcvt.s32.f32 %v2105
  %2108 = vmin.xlane.f32.xlu0 %v2107
  %v2109 = vpop.xlane.xlu0 %2108
  %vm2110 = vcmp.eq.f32.partialorder %v2107, %v2109
  %v2111 = vsel %vm2110, %v2106, inf
  %2112 = vmin.xlane.f32.xlu0 %v2111
  %v2113 = vpop.xlane.xlu0 %2112
  %v2114 = vcvt.f32.s32 %v2113
  %v2115 = vcvt.f32.s32 %v2109
  %v2116 = vshll.u32 %v2115, 16
  %v2117 = vadd.s32 %v2116, %v2114
  %v2118 = vand.u32 %v1933, 65535
  %v2119 = vshra.s32 %v1933, 16
  %v2120 = vcvt.s32.f32 %v2118
  %v2121 = vcvt.s32.f32 %v2119
  %2122 = vmin.xlane.f32.xlu0 %v2121
  %v2123 = vpop.xlane.xlu0 %2122
  %vm2124 = vcmp.eq.f32.partialorder %v2121, %v2123
  %v2125 = vsel %vm2124, %v2120, inf
  %2126 = vmin.xlane.f32.xlu0 %v2125
  %v2127 = vpop.xlane.xlu0 %2126
  %v2128 = vcvt.f32.s32 %v2127
  %v2129 = vcvt.f32.s32 %v2123
  %v2130 = vshll.u32 %v2129, 16
  %v2131 = vadd.s32 %v2130, %v2128
  %v2132 = vand.u32 %v1934, 65535
  %v2133 = vshra.s32 %v1934, 16
  %v2134 = vcvt.s32.f32 %v2132
  %v2135 = vcvt.s32.f32 %v2133
  %2136 = vmin.xlane.f32.xlu0 %v2135
  %v2137 = vpop.xlane.xlu0 %2136
  %vm2138 = vcmp.eq.f32.partialorder %v2135, %v2137
  %v2139 = vsel %vm2138, %v2134, inf
  %2140 = vmin.xlane.f32.xlu0 %v2139
  %v2141 = vpop.xlane.xlu0 %2140
  %v2142 = vcvt.f32.s32 %v2141
  %v2143 = vcvt.f32.s32 %v2137
  %v2144 = vshll.u32 %v2143, 16
  %v2145 = vadd.s32 %v2144, %v2142
  %v2146 = vand.u32 %v1935, 65535
  %v2147 = vshra.s32 %v1935, 16
  %v2148 = vcvt.s32.f32 %v2146
  %v2149 = vcvt.s32.f32 %v2147
  %2150 = vmin.xlane.f32.xlu0 %v2149
  %v2151 = vpop.xlane.xlu0 %2150
  %vm2152 = vcmp.eq.f32.partialorder %v2149, %v2151
  %v2153 = vsel %vm2152, %v2148, inf
  %2154 = vmin.xlane.f32.xlu0 %v2153
  %v2155 = vpop.xlane.xlu0 %2154
  %v2156 = vcvt.f32.s32 %v2155
  %v2157 = vcvt.f32.s32 %v2151
  %v2158 = vshll.u32 %v2157, 16
  %v2159 = vadd.s32 %v2158, %v2156
  %vm2160 = vcmp.eq.s32.totalorder %v399, %v1949
  %vm2161 = vcmp.eq.s32.totalorder %v399, %v1963
  %vm2162 = vcmp.eq.s32.totalorder %v399, %v1977
  %vm2163 = vcmp.eq.s32.totalorder %v399, %v1991
  %vm2164 = vcmp.eq.s32.totalorder %v399, %v2005
  %vm2165 = vcmp.eq.s32.totalorder %v399, %v2019
  %vm2166 = vcmp.eq.s32.totalorder %v399, %v2033
  %vm2167 = vcmp.eq.s32.totalorder %v399, %v2047
  %vm2168 = vcmp.eq.s32.totalorder %v399, %v2061
  %vm2169 = vcmp.eq.s32.totalorder %v399, %v2075
  %vm2170 = vcmp.eq.s32.totalorder %v399, %v2089
  %vm2171 = vcmp.eq.s32.totalorder %v399, %v2103
  %vm2172 = vcmp.eq.s32.totalorder %v399, %v2117
  %vm2173 = vcmp.eq.s32.totalorder %v399, %v2131
  %vm2174 = vcmp.eq.s32.totalorder %v399, %v2145
  %vm2175 = vcmp.eq.s32.totalorder %v399, %v2159
  %v2176 = vsel %vm2160, %v1678, %v1568
  %v2177 = vsel %vm2161, %v1693, %v1569
  %v2178 = vsel %vm2162, %v1708, %v1570
  %v2179 = vsel %vm2163, %v1723, %v1571
  %v2180 = vsel %vm2164, %v1738, %v1572
  %v2181 = vsel %vm2165, %v1753, %v1573
  %v2182 = vsel %vm2166, %v1768, %v1574
  %v2183 = vsel %vm2167, %v1783, %v1575
  %v2184 = vsel %vm2168, %v1798, %v1576
  %v2185 = vsel %vm2169, %v1813, %v1577
  %v2186 = vsel %vm2170, %v1828, %v1578
  %v2187 = vsel %vm2171, %v1843, %v1579
  %v2188 = vsel %vm2172, %v1858, %v1580
  %v2189 = vsel %vm2173, %v1873, %v1581
  %v2190 = vsel %vm2174, %v1888, %v1582
  %v2191 = vsel %vm2175, %v1903, %v1583
  %v2192 = vadd.f32 %v1584, %v1678
  %v2193 = vadd.f32 %v1585, %v1693
  %v2194 = vadd.f32 %v1586, %v1708
  %v2195 = vadd.f32 %v1587, %v1723
  %v2196 = vadd.f32 %v1588, %v1738
  %v2197 = vadd.f32 %v1589, %v1753
  %v2198 = vadd.f32 %v1590, %v1768
  %v2199 = vadd.f32 %v1591, %v1783
  %v2200 = vadd.f32 %v1592, %v1798
  %v2201 = vadd.f32 %v1593, %v1813
  %v2202 = vadd.f32 %v1594, %v1828
  %v2203 = vadd.f32 %v1595, %v1843
  %v2204 = vadd.f32 %v1596, %v1858
  %v2205 = vadd.f32 %v1597, %v1873
  %v2206 = vadd.f32 %v1598, %v1888
  %v2207 = vadd.f32 %v1599, %v1903
  %2208 = vmatpush.msra.mxu0 %v58
  %2209 = vmatpush.msra.mxu0 %v57
  %2210 = vmatpush.msra.mxu0 %v56
  %2211 = vmatpush.msra.mxu0 %v55
  %2212 = vmatpush.msra.mxu0 %v54
  %2213 = vmatpush.msra.mxu0 %v53
  %2214 = vmatpush.msra.mxu0 %v52
  %2215 = vmatpush.msra.mxu0 %v51
  %2216 = vmatpush.msra.mxu0 %v50
  %2217 = vmatpush.msra.mxu0 %v49
  %2218 = vmatpush.msra.mxu0 %v48
  %2219 = vmatpush.msra.mxu0 %v47
  %2220 = vmatpush.msra.mxu0 %v46
  %2221 = vmatpush.msra.mxu0 %v45
  %2222 = vmatpush.msra.mxu0 %v44
  %2223 = vmatpush.msra.mxu0 %v43
  %2224 = vmatmul.f32.gmra.mxu0 %v2176
  %v2225 = vpop.f32.mrf.mxu0
  %v2226 = vadd.f32 0.0, %v2225
  %2227 = vmatmul.f32.gmra.mxu0 %v2177
  %v2228 = vpop.f32.mrf.mxu0
  %v2229 = vadd.f32 0.0, %v2228
  %2230 = vmatmul.f32.gmra.mxu0 %v2178
  %v2231 = vpop.f32.mrf.mxu0
  %v2232 = vadd.f32 0.0, %v2231
  %2233 = vmatmul.f32.gmra.mxu0 %v2179
  %v2234 = vpop.f32.mrf.mxu0
  %v2235 = vadd.f32 0.0, %v2234
  %2236 = vmatmul.f32.gmra.mxu0 %v2180
  %v2237 = vpop.f32.mrf.mxu0
  %v2238 = vadd.f32 0.0, %v2237
  %2239 = vmatmul.f32.gmra.mxu0 %v2181
  %v2240 = vpop.f32.mrf.mxu0
  %v2241 = vadd.f32 0.0, %v2240
  %2242 = vmatmul.f32.gmra.mxu0 %v2182
  %v2243 = vpop.f32.mrf.mxu0
  %v2244 = vadd.f32 0.0, %v2243
  %2245 = vmatmul.f32.gmra.mxu0 %v2183
  %v2246 = vpop.f32.mrf.mxu0
  %v2247 = vadd.f32 0.0, %v2246
  %2248 = vmatmul.f32.gmra.mxu0 %v2184
  %v2249 = vpop.f32.mrf.mxu0
  %v2250 = vadd.f32 0.0, %v2249
  %2251 = vmatmul.f32.gmra.mxu0 %v2185
  %v2252 = vpop.f32.mrf.mxu0
  %v2253 = vadd.f32 0.0, %v2252
  %2254 = vmatmul.f32.gmra.mxu0 %v2186
  %v2255 = vpop.f32.mrf.mxu0
  %v2256 = vadd.f32 0.0, %v2255
  %2257 = vmatmul.f32.gmra.mxu0 %v2187
  %v2258 = vpop.f32.mrf.mxu0
  %v2259 = vadd.f32 0.0, %v2258
  %2260 = vmatmul.f32.gmra.mxu0 %v2188
  %v2261 = vpop.f32.mrf.mxu0
  %v2262 = vadd.f32 0.0, %v2261
  %2263 = vmatmul.f32.gmra.mxu0 %v2189
  %v2264 = vpop.f32.mrf.mxu0
  %v2265 = vadd.f32 0.0, %v2264
  %2266 = vmatmul.f32.gmra.mxu0 %v2190
  %v2267 = vpop.f32.mrf.mxu0
  %v2268 = vadd.f32 0.0, %v2267
  %2269 = vmatmul.f32.gmra.mxu0 %v2191
  %v2270 = vpop.f32.mrf.mxu0
  %v2271 = vadd.f32 0.0, %v2270
  %2272 = vdwg.mxu0
  %v2273 = vrcp.pop %v2192
  %v2274 = vmul.f32 %v2192, %v2273
  %v2275 = vsub.f32 1.0, %v2274
  %v2276 = vmul.f32 %v2273, %v2275
  %v2277 = vadd.f32 %v2273, %v2276
  %vm2278 = vweird.f32 %v2192
  %vm2279 = vweird.f32 %v2273
  %vm2280 = vmor %vm2278, %vm2279
  %v2281 = vsel %vm2280, %v2273, %v2277
  %v2282 = vand.u32 2147483647, %v2192
  %vm2283 = vcmp.eq.f32.partialorder %v2282, 8.507059e+37
  %v2284 = vand.u32 %v2192, 2147483648
  %v2285 = vor.u32 1.1754944e-38, %v2284
  %v2286 = vsel %vm2283, %v2285, %v2281
  %v2287 = vmul.f32 1.0, %v2286
  %v2288 = vrcp.pop %v2193
  %v2289 = vmul.f32 %v2193, %v2288
  %v2290 = vsub.f32 1.0, %v2289
  %v2291 = vmul.f32 %v2288, %v2290
  %v2292 = vadd.f32 %v2288, %v2291
  %vm2293 = vweird.f32 %v2193
  %vm2294 = vweird.f32 %v2288
  %vm2295 = vmor %vm2293, %vm2294
  %v2296 = vsel %vm2295, %v2288, %v2292
  %v2297 = vand.u32 2147483647, %v2193
  %vm2298 = vcmp.eq.f32.partialorder %v2297, 8.507059e+37
  %v2299 = vand.u32 %v2193, 2147483648
  %v2300 = vor.u32 1.1754944e-38, %v2299
  %v2301 = vsel %vm2298, %v2300, %v2296
  %v2302 = vmul.f32 1.0, %v2301
  %v2303 = vrcp.pop %v2194
  %v2304 = vmul.f32 %v2194, %v2303
  %v2305 = vsub.f32 1.0, %v2304
  %v2306 = vmul.f32 %v2303, %v2305
  %v2307 = vadd.f32 %v2303, %v2306
  %vm2308 = vweird.f32 %v2194
  %vm2309 = vweird.f32 %v2303
  %vm2310 = vmor %vm2308, %vm2309
  %v2311 = vsel %vm2310, %v2303, %v2307
  %v2312 = vand.u32 2147483647, %v2194
  %vm2313 = vcmp.eq.f32.partialorder %v2312, 8.507059e+37
  %v2314 = vand.u32 %v2194, 2147483648
  %v2315 = vor.u32 1.1754944e-38, %v2314
  %v2316 = vsel %vm2313, %v2315, %v2311
  %v2317 = vmul.f32 1.0, %v2316
  %v2318 = vrcp.pop %v2195
  %v2319 = vmul.f32 %v2195, %v2318
  %v2320 = vsub.f32 1.0, %v2319
  %v2321 = vmul.f32 %v2318, %v2320
  %v2322 = vadd.f32 %v2318, %v2321
  %vm2323 = vweird.f32 %v2195
  %vm2324 = vweird.f32 %v2318
  %vm2325 = vmor %vm2323, %vm2324
  %v2326 = vsel %vm2325, %v2318, %v2322
  %v2327 = vand.u32 2147483647, %v2195
  %vm2328 = vcmp.eq.f32.partialorder %v2327, 8.507059e+37
  %v2329 = vand.u32 %v2195, 2147483648
  %v2330 = vor.u32 1.1754944e-38, %v2329
  %v2331 = vsel %vm2328, %v2330, %v2326
  %v2332 = vmul.f32 1.0, %v2331
  %v2333 = vrcp.pop %v2196
  %v2334 = vmul.f32 %v2196, %v2333
  %v2335 = vsub.f32 1.0, %v2334
  %v2336 = vmul.f32 %v2333, %v2335
  %v2337 = vadd.f32 %v2333, %v2336
  %vm2338 = vweird.f32 %v2196
  %vm2339 = vweird.f32 %v2333
  %vm2340 = vmor %vm2338, %vm2339
  %v2341 = vsel %vm2340, %v2333, %v2337
  %v2342 = vand.u32 2147483647, %v2196
  %vm2343 = vcmp.eq.f32.partialorder %v2342, 8.507059e+37
  %v2344 = vand.u32 %v2196, 2147483648
  %v2345 = vor.u32 1.1754944e-38, %v2344
  %v2346 = vsel %vm2343, %v2345, %v2341
  %v2347 = vmul.f32 1.0, %v2346
  %v2348 = vrcp.pop %v2197
  %v2349 = vmul.f32 %v2197, %v2348
  %v2350 = vsub.f32 1.0, %v2349
  %v2351 = vmul.f32 %v2348, %v2350
  %v2352 = vadd.f32 %v2348, %v2351
  %vm2353 = vweird.f32 %v2197
  %vm2354 = vweird.f32 %v2348
  %vm2355 = vmor %vm2353, %vm2354
  %v2356 = vsel %vm2355, %v2348, %v2352
  %v2357 = vand.u32 2147483647, %v2197
  %vm2358 = vcmp.eq.f32.partialorder %v2357, 8.507059e+37
  %v2359 = vand.u32 %v2197, 2147483648
  %v2360 = vor.u32 1.1754944e-38, %v2359
  %v2361 = vsel %vm2358, %v2360, %v2356
  %v2362 = vmul.f32 1.0, %v2361
  %v2363 = vrcp.pop %v2198
  %v2364 = vmul.f32 %v2198, %v2363
  %v2365 = vsub.f32 1.0, %v2364
  %v2366 = vmul.f32 %v2363, %v2365
  %v2367 = vadd.f32 %v2363, %v2366
  %vm2368 = vweird.f32 %v2198
  %vm2369 = vweird.f32 %v2363
  %vm2370 = vmor %vm2368, %vm2369
  %v2371 = vsel %vm2370, %v2363, %v2367
  %v2372 = vand.u32 2147483647, %v2198
  %vm2373 = vcmp.eq.f32.partialorder %v2372, 8.507059e+37
  %v2374 = vand.u32 %v2198, 2147483648
  %v2375 = vor.u32 1.1754944e-38, %v2374
  %v2376 = vsel %vm2373, %v2375, %v2371
  %v2377 = vmul.f32 1.0, %v2376
  %v2378 = vrcp.pop %v2199
  %v2379 = vmul.f32 %v2199, %v2378
  %v2380 = vsub.f32 1.0, %v2379
  %v2381 = vmul.f32 %v2378, %v2380
  %v2382 = vadd.f32 %v2378, %v2381
  %vm2383 = vweird.f32 %v2199
  %vm2384 = vweird.f32 %v2378
  %vm2385 = vmor %vm2383, %vm2384
  %v2386 = vsel %vm2385, %v2378, %v2382
  %v2387 = vand.u32 2147483647, %v2199
  %vm2388 = vcmp.eq.f32.partialorder %v2387, 8.507059e+37
  %v2389 = vand.u32 %v2199, 2147483648
  %v2390 = vor.u32 1.1754944e-38, %v2389
  %v2391 = vsel %vm2388, %v2390, %v2386
  %v2392 = vmul.f32 1.0, %v2391
  %v2393 = vrcp.pop %v2200
  %v2394 = vmul.f32 %v2200, %v2393
  %v2395 = vsub.f32 1.0, %v2394
  %v2396 = vmul.f32 %v2393, %v2395
  %v2397 = vadd.f32 %v2393, %v2396
  %vm2398 = vweird.f32 %v2200
  %vm2399 = vweird.f32 %v2393
  %vm2400 = vmor %vm2398, %vm2399
  %v2401 = vsel %vm2400, %v2393, %v2397
  %v2402 = vand.u32 2147483647, %v2200
  %vm2403 = vcmp.eq.f32.partialorder %v2402, 8.507059e+37
  %v2404 = vand.u32 %v2200, 2147483648
  %v2405 = vor.u32 1.1754944e-38, %v2404
  %v2406 = vsel %vm2403, %v2405, %v2401
  %v2407 = vmul.f32 1.0, %v2406
  %v2408 = vrcp.pop %v2201
  %v2409 = vmul.f32 %v2201, %v2408
  %v2410 = vsub.f32 1.0, %v2409
  %v2411 = vmul.f32 %v2408, %v2410
  %v2412 = vadd.f32 %v2408, %v2411
  %vm2413 = vweird.f32 %v2201
  %vm2414 = vweird.f32 %v2408
  %vm2415 = vmor %vm2413, %vm2414
  %v2416 = vsel %vm2415, %v2408, %v2412
  %v2417 = vand.u32 2147483647, %v2201
  %vm2418 = vcmp.eq.f32.partialorder %v2417, 8.507059e+37
  %v2419 = vand.u32 %v2201, 2147483648
  %v2420 = vor.u32 1.1754944e-38, %v2419
  %v2421 = vsel %vm2418, %v2420, %v2416
  %v2422 = vmul.f32 1.0, %v2421
  %v2423 = vrcp.pop %v2202
  %v2424 = vmul.f32 %v2202, %v2423
  %v2425 = vsub.f32 1.0, %v2424
  %v2426 = vmul.f32 %v2423, %v2425
  %v2427 = vadd.f32 %v2423, %v2426
  %vm2428 = vweird.f32 %v2202
  %vm2429 = vweird.f32 %v2423
  %vm2430 = vmor %vm2428, %vm2429
  %v2431 = vsel %vm2430, %v2423, %v2427
  %v2432 = vand.u32 2147483647, %v2202
  %vm2433 = vcmp.eq.f32.partialorder %v2432, 8.507059e+37
  %v2434 = vand.u32 %v2202, 2147483648
  %v2435 = vor.u32 1.1754944e-38, %v2434
  %v2436 = vsel %vm2433, %v2435, %v2431
  %v2437 = vmul.f32 1.0, %v2436
  %v2438 = vrcp.pop %v2203
  %v2439 = vmul.f32 %v2203, %v2438
  %v2440 = vsub.f32 1.0, %v2439
  %v2441 = vmul.f32 %v2438, %v2440
  %v2442 = vadd.f32 %v2438, %v2441
  %vm2443 = vweird.f32 %v2203
  %vm2444 = vweird.f32 %v2438
  %vm2445 = vmor %vm2443, %vm2444
  %v2446 = vsel %vm2445, %v2438, %v2442
  %v2447 = vand.u32 2147483647, %v2203
  %vm2448 = vcmp.eq.f32.partialorder %v2447, 8.507059e+37
  %v2449 = vand.u32 %v2203, 2147483648
  %v2450 = vor.u32 1.1754944e-38, %v2449
  %v2451 = vsel %vm2448, %v2450, %v2446
  %v2452 = vmul.f32 1.0, %v2451
  %v2453 = vrcp.pop %v2204
  %v2454 = vmul.f32 %v2204, %v2453
  %v2455 = vsub.f32 1.0, %v2454
  %v2456 = vmul.f32 %v2453, %v2455
  %v2457 = vadd.f32 %v2453, %v2456
  %vm2458 = vweird.f32 %v2204
  %vm2459 = vweird.f32 %v2453
  %vm2460 = vmor %vm2458, %vm2459
  %v2461 = vsel %vm2460, %v2453, %v2457
  %v2462 = vand.u32 2147483647, %v2204
  %vm2463 = vcmp.eq.f32.partialorder %v2462, 8.507059e+37
  %v2464 = vand.u32 %v2204, 2147483648
  %v2465 = vor.u32 1.1754944e-38, %v2464
  %v2466 = vsel %vm2463, %v2465, %v2461
  %v2467 = vmul.f32 1.0, %v2466
  %v2468 = vrcp.pop %v2205
  %v2469 = vmul.f32 %v2205, %v2468
  %v2470 = vsub.f32 1.0, %v2469
  %v2471 = vmul.f32 %v2468, %v2470
  %v2472 = vadd.f32 %v2468, %v2471
  %vm2473 = vweird.f32 %v2205
  %vm2474 = vweird.f32 %v2468
  %vm2475 = vmor %vm2473, %vm2474
  %v2476 = vsel %vm2475, %v2468, %v2472
  %v2477 = vand.u32 2147483647, %v2205
  %vm2478 = vcmp.eq.f32.partialorder %v2477, 8.507059e+37
  %v2479 = vand.u32 %v2205, 2147483648
  %v2480 = vor.u32 1.1754944e-38, %v2479
  %v2481 = vsel %vm2478, %v2480, %v2476
  %v2482 = vmul.f32 1.0, %v2481
  %v2483 = vrcp.pop %v2206
  %v2484 = vmul.f32 %v2206, %v2483
  %v2485 = vsub.f32 1.0, %v2484
  %v2486 = vmul.f32 %v2483, %v2485
  %v2487 = vadd.f32 %v2483, %v2486
  %vm2488 = vweird.f32 %v2206
  %vm2489 = vweird.f32 %v2483
  %vm2490 = vmor %vm2488, %vm2489
  %v2491 = vsel %vm2490, %v2483, %v2487
  %v2492 = vand.u32 2147483647, %v2206
  %vm2493 = vcmp.eq.f32.partialorder %v2492, 8.507059e+37
  %v2494 = vand.u32 %v2206, 2147483648
  %v2495 = vor.u32 1.1754944e-38, %v2494
  %v2496 = vsel %vm2493, %v2495, %v2491
  %v2497 = vmul.f32 1.0, %v2496
  %v2498 = vrcp.pop %v2207
  %v2499 = vmul.f32 %v2207, %v2498
  %v2500 = vsub.f32 1.0, %v2499
  %v2501 = vmul.f32 %v2498, %v2500
  %v2502 = vadd.f32 %v2498, %v2501
  %vm2503 = vweird.f32 %v2207
  %vm2504 = vweird.f32 %v2498
  %vm2505 = vmor %vm2503, %vm2504
  %v2506 = vsel %vm2505, %v2498, %v2502
  %v2507 = vand.u32 2147483647, %v2207
  %vm2508 = vcmp.eq.f32.partialorder %v2507, 8.507059e+37
  %v2509 = vand.u32 %v2207, 2147483648
  %v2510 = vor.u32 1.1754944e-38, %v2509
  %v2511 = vsel %vm2508, %v2510, %v2506
  %v2512 = vmul.f32 1.0, %v2511
  %v2513 = vmul.f32 %v2226, %v2287
  %v2514 = vmul.f32 %v2229, %v2302
  %v2515 = vmul.f32 %v2232, %v2317
  %v2516 = vmul.f32 %v2235, %v2332
  %v2517 = vmul.f32 %v2238, %v2347
  %v2518 = vmul.f32 %v2241, %v2362
  %v2519 = vmul.f32 %v2244, %v2377
  %v2520 = vmul.f32 %v2247, %v2392
  %v2521 = vmul.f32 %v2250, %v2407
  %v2522 = vmul.f32 %v2253, %v2422
  %v2523 = vmul.f32 %v2256, %v2437
  %v2524 = vmul.f32 %v2259, %v2452
  %v2525 = vmul.f32 %v2262, %v2467
  %v2526 = vmul.f32 %v2265, %v2482
  %v2527 = vmul.f32 %v2268, %v2497
  %v2528 = vmul.f32 %v2271, %v2512
  %v2529 = vld [vmem:[%s3] sm:$0xff]
  %v2530 = vld [vmem:[%s3 + $0x8] sm:$0xff]
  %v2531 = vld [vmem:[%s3 + $0x10] sm:$0xff]
  %v2532 = vld [vmem:[%s3 + $0x18] sm:$0xff]
  %v2533 = vld [vmem:[%s4] sm:$0x1]
  %v2535 = vperm.slane %v2533, 0
  %vm2537 = vcmask 261120
  %v2539 = vsel %vm2537, %v2513, 0
  %v2542 = vsel %vm2537, %v2514, 0
  %v2545 = vsel %vm2537, %v2515, 0
  %v2548 = vsel %vm2537, %v2516, 0
  %v2551 = vsel %vm2537, %v2517, 0
  %v2554 = vsel %vm2537, %v2518, 0
  %v2557 = vsel %vm2537, %v2519, 0
  %v2560 = vsel %vm2537, %v2520, 0
  %v2563 = vsel %vm2537, %v2521, 0
  %v2566 = vsel %vm2537, %v2522, 0
  %v2569 = vsel %vm2537, %v2523, 0
  %v2572 = vsel %vm2537, %v2524, 0
  %v2575 = vsel %vm2537, %v2525, 0
  %v2578 = vsel %vm2537, %v2526, 0
  %v2581 = vsel %vm2537, %v2527, 0
  %v2584 = vsel %vm2537, %v2528, 0
  %2586 = vmatpush.msra.mxu0 0.0
  %2587 = vmatpush.msra.mxu0 0.0
  %2588 = vmatpush.msra.mxu0 0.0
  %2589 = vmatpush.msra.mxu0 0.0
  %2590 = vmatpush.msra.mxu0 0.0
  %2591 = vmatpush.msra.mxu0 0.0
  %2592 = vmatpush.msra.mxu0 0.0
  %2593 = vmatpush.msra.mxu0 0.0
  %2594 = vmatpush.msra.mxu0 0.0
  %2595 = vmatpush.msra.mxu0 0.0
  %2596 = vmatpush.msra.mxu0 0.0
  %2597 = vmatpush.msra.mxu0 0.0
  %2598 = vmatpush.msra.mxu0 %v2532
  %2599 = vmatpush.msra.mxu0 %v2531
  %2600 = vmatpush.msra.mxu0 %v2530
  %2601 = vmatpush.msra.mxu0 %v2529
  %2602 = vmatmul.f32.gmra.mxu0 %v2539
  %v2603 = vpop.f32.mrf.mxu0
  %v2604 = vadd.f32 %v2535, %v2603
  %2605 = vmatmul.f32.gmra.mxu0 %v2542
  %v2606 = vpop.f32.mrf.mxu0
  %v2607 = vadd.f32 %v2535, %v2606
  %2608 = vmatmul.f32.gmra.mxu0 %v2545
  %v2609 = vpop.f32.mrf.mxu0
  %v2610 = vadd.f32 %v2535, %v2609
  %2611 = vmatmul.f32.gmra.mxu0 %v2548
  %v2612 = vpop.f32.mrf.mxu0
  %v2613 = vadd.f32 %v2535, %v2612
  %2614 = vmatmul.f32.gmra.mxu0 %v2551
  %v2615 = vpop.f32.mrf.mxu0
  %v2616 = vadd.f32 %v2535, %v2615
  %2617 = vmatmul.f32.gmra.mxu0 %v2554
  %v2618 = vpop.f32.mrf.mxu0
  %v2619 = vadd.f32 %v2535, %v2618
  %2620 = vmatmul.f32.gmra.mxu0 %v2557
  %v2621 = vpop.f32.mrf.mxu0
  %v2622 = vadd.f32 %v2535, %v2621
  %2623 = vmatmul.f32.gmra.mxu0 %v2560
  %v2624 = vpop.f32.mrf.mxu0
  %v2625 = vadd.f32 %v2535, %v2624
  %2626 = vmatmul.f32.gmra.mxu0 %v2563
  %v2627 = vpop.f32.mrf.mxu0
  %v2628 = vadd.f32 %v2535, %v2627
  %2629 = vmatmul.f32.gmra.mxu0 %v2566
  %v2630 = vpop.f32.mrf.mxu0
  %v2631 = vadd.f32 %v2535, %v2630
  %2632 = vmatmul.f32.gmra.mxu0 %v2569
  %v2633 = vpop.f32.mrf.mxu0
  %v2634 = vadd.f32 %v2535, %v2633
  %2635 = vmatmul.f32.gmra.mxu0 %v2572
  %v2636 = vpop.f32.mrf.mxu0
  %v2637 = vadd.f32 %v2535, %v2636
  %2638 = vmatmul.f32.gmra.mxu0 %v2575
  %v2639 = vpop.f32.mrf.mxu0
  %v2640 = vadd.f32 %v2535, %v2639
  %2641 = vmatmul.f32.gmra.mxu0 %v2578
  %v2642 = vpop.f32.mrf.mxu0
  %v2643 = vadd.f32 %v2535, %v2642
  %2644 = vmatmul.f32.gmra.mxu0 %v2581
  %v2645 = vpop.f32.mrf.mxu0
  %v2646 = vadd.f32 %v2535, %v2645
  %2647 = vmatmul.f32.gmra.mxu0 %v2584
  %v2648 = vpop.f32.mrf.mxu0
  %v2649 = vadd.f32 %v2535, %v2648
  %2650 = vdwg.mxu0
  %v2651 = vmax.f32 %v2604, 0.0
  %v2652 = vmax.f32 %v2607, 0.0
  %v2653 = vmax.f32 %v2610, 0.0
  %v2654 = vmax.f32 %v2613, 0.0
  %v2655 = vmax.f32 %v2616, 0.0
  %v2656 = vmax.f32 %v2619, 0.0
  %v2657 = vmax.f32 %v2622, 0.0
  %v2658 = vmax.f32 %v2625, 0.0
  %v2659 = vmax.f32 %v2628, 0.0
  %v2660 = vmax.f32 %v2631, 0.0
  %v2661 = vmax.f32 %v2634, 0.0
  %v2662 = vmax.f32 %v2637, 0.0
  %v2663 = vmax.f32 %v2640, 0.0
  %v2664 = vmax.f32 %v2643, 0.0
  %v2665 = vmax.f32 %v2646, 0.0
  %v2666 = vmax.f32 %v2649, 0.0
  %v2667 = vld [vmem:[%s5] sm:$0xff]
  %v2668 = vld [vmem:[%s5 + $0x8] sm:$0xff]
  %v2669 = vld [vmem:[%s5 + $0x10] sm:$0xff]
  %v2670 = vld [vmem:[%s5 + $0x18] sm:$0xff]
  %v2671 = vld [vmem:[%s5 + $0x20] sm:$0xff]
  %v2672 = vld [vmem:[%s5 + $0x28] sm:$0xff]
  %v2673 = vld [vmem:[%s5 + $0x30] sm:$0xff]
  %v2674 = vld [vmem:[%s5 + $0x38] sm:$0xff]
  %v2675 = vld [vmem:[%s6] sm:$0x1]
  %v2677 = vperm.slane %v2675, 0
  %vm2679 = vcmask 523264
  %v2681 = vsel %vm2679, %v2651, 0
  %v2684 = vsel %vm2679, %v2652, 0
  %v2687 = vsel %vm2679, %v2653, 0
  %v2690 = vsel %vm2679, %v2654, 0
  %v2693 = vsel %vm2679, %v2655, 0
  %v2696 = vsel %vm2679, %v2656, 0
  %v2699 = vsel %vm2679, %v2657, 0
  %v2702 = vsel %vm2679, %v2658, 0
  %v2705 = vsel %vm2679, %v2659, 0
  %v2708 = vsel %vm2679, %v2660, 0
  %v2711 = vsel %vm2679, %v2661, 0
  %v2714 = vsel %vm2679, %v2662, 0
  %v2717 = vsel %vm2679, %v2663, 0
  %v2720 = vsel %vm2679, %v2664, 0
  %v2723 = vsel %vm2679, %v2665, 0
  %v2726 = vsel %vm2679, %v2666, 0
  %2728 = vmatpush.msra.mxu0 0.0
  %2729 = vmatpush.msra.mxu0 0.0
  %2730 = vmatpush.msra.mxu0 0.0
  %2731 = vmatpush.msra.mxu0 0.0
  %2732 = vmatpush.msra.mxu0 0.0
  %2733 = vmatpush.msra.mxu0 0.0
  %2734 = vmatpush.msra.mxu0 0.0
  %2735 = vmatpush.msra.mxu0 0.0
  %2736 = vmatpush.msra.mxu0 %v2674
  %2737 = vmatpush.msra.mxu0 %v2673
  %2738 = vmatpush.msra.mxu0 %v2672
  %2739 = vmatpush.msra.mxu0 %v2671
  %2740 = vmatpush.msra.mxu0 %v2670
  %2741 = vmatpush.msra.mxu0 %v2669
  %2742 = vmatpush.msra.mxu0 %v2668
  %2743 = vmatpush.msra.mxu0 %v2667
  %2744 = vmatmul.f32.gmra.mxu0 %v2681
  %v2745 = vpop.f32.mrf.mxu0
  %v2746 = vadd.f32 %v2677, %v2745
  %2747 = vmatmul.f32.gmra.mxu0 %v2684
  %v2748 = vpop.f32.mrf.mxu0
  %v2749 = vadd.f32 %v2677, %v2748
  %2750 = vmatmul.f32.gmra.mxu0 %v2687
  %v2751 = vpop.f32.mrf.mxu0
  %v2752 = vadd.f32 %v2677, %v2751
  %2753 = vmatmul.f32.gmra.mxu0 %v2690
  %v2754 = vpop.f32.mrf.mxu0
  %v2755 = vadd.f32 %v2677, %v2754
  %2756 = vmatmul.f32.gmra.mxu0 %v2693
  %v2757 = vpop.f32.mrf.mxu0
  %v2758 = vadd.f32 %v2677, %v2757
  %2759 = vmatmul.f32.gmra.mxu0 %v2696
  %v2760 = vpop.f32.mrf.mxu0
  %v2761 = vadd.f32 %v2677, %v2760
  %2762 = vmatmul.f32.gmra.mxu0 %v2699
  %v2763 = vpop.f32.mrf.mxu0
  %v2764 = vadd.f32 %v2677, %v2763
  %2765 = vmatmul.f32.gmra.mxu0 %v2702
  %v2766 = vpop.f32.mrf.mxu0
  %v2767 = vadd.f32 %v2677, %v2766
  %2768 = vmatmul.f32.gmra.mxu0 %v2705
  %v2769 = vpop.f32.mrf.mxu0
  %v2770 = vadd.f32 %v2677, %v2769
  %2771 = vmatmul.f32.gmra.mxu0 %v2708
  %v2772 = vpop.f32.mrf.mxu0
  %v2773 = vadd.f32 %v2677, %v2772
  %2774 = vmatmul.f32.gmra.mxu0 %v2711
  %v2775 = vpop.f32.mrf.mxu0
  %v2776 = vadd.f32 %v2677, %v2775
  %2777 = vmatmul.f32.gmra.mxu0 %v2714
  %v2778 = vpop.f32.mrf.mxu0
  %v2779 = vadd.f32 %v2677, %v2778
  %2780 = vmatmul.f32.gmra.mxu0 %v2717
  %v2781 = vpop.f32.mrf.mxu0
  %v2782 = vadd.f32 %v2677, %v2781
  %2783 = vmatmul.f32.gmra.mxu0 %v2720
  %v2784 = vpop.f32.mrf.mxu0
  %v2785 = vadd.f32 %v2677, %v2784
  %2786 = vmatmul.f32.gmra.mxu0 %v2723
  %v2787 = vpop.f32.mrf.mxu0
  %v2788 = vadd.f32 %v2677, %v2787
  %2789 = vmatmul.f32.gmra.mxu0 %v2726
  %v2790 = vpop.f32.mrf.mxu0
  %v2791 = vadd.f32 %v2677, %v2790
  %2792 = vdwg.mxu0
  %2793 = vst.msk [vmem:[%s7] sm:$0xff] %vm2537, %v2746
  %2794 = vst.msk [vmem:[%s7 + $0x8] sm:$0xff] %vm2537, %v2749
  %2795 = vst.msk [vmem:[%s7 + $0x10] sm:$0xff] %vm2537, %v2752
  %2796 = vst.msk [vmem:[%s7 + $0x18] sm:$0xff] %vm2537, %v2755
  %2797 = vst.msk [vmem:[%s7 + $0x20] sm:$0xff] %vm2537, %v2758
  %2798 = vst.msk [vmem:[%s7 + $0x28] sm:$0xff] %vm2537, %v2761
  %2799 = vst.msk [vmem:[%s7 + $0x30] sm:$0xff] %vm2537, %v2764
  %2800 = vst.msk [vmem:[%s7 + $0x38] sm:$0xff] %vm2537, %v2767
  %2801 = vst.msk [vmem:[%s7 + $0x40] sm:$0xff] %vm2537, %v2770
  %2802 = vst.msk [vmem:[%s7 + $0x48] sm:$0xff] %vm2537, %v2773
  %2803 = vst.msk [vmem:[%s7 + $0x50] sm:$0xff] %vm2537, %v2776
  %2804 = vst.msk [vmem:[%s7 + $0x58] sm:$0xff] %vm2537, %v2779
  %2805 = vst.msk [vmem:[%s7 + $0x60] sm:$0xff] %vm2537, %v2782
  %2806 = vst.msk [vmem:[%s7 + $0x68] sm:$0xff] %vm2537, %v2785
  %2807 = vst.msk [vmem:[%s7 + $0x70] sm:$0xff] %vm2537, %v2788
  %2808 = vst.msk [vmem:[%s7 + $0x78] sm:$0xff] %vm2537, %v2791
  // Predicated region
  $region30: #{tpu_custom_call.1} parent=0 // pred_check
    _
  $region31: #{tpu_custom_call.1} parent=0 // pred_check_branch
    %2810 = sbr.rel (0) target = $region33
  $region32: #{tpu_custom_call.1} parent=0 // pred_region
    _
  $region33: #{tpu_custom_call.1} parent=0 // pred_fallthru
    _
  // Predicated region
  $region34: #{tpu_custom_call.1} parent=0 // pred_check
    _
  $region35: #{tpu_custom_call.1} parent=0 // pred_check_branch
    %2812 = sbr.rel (0) target = $region37
  $region36: #{tpu_custom_call.1} parent=0 // pred_region
    _
  $region37: #{tpu_custom_call.1} parent=0 // pred_fallthru
    _

</llo_original>
